<compile_context>
chip_gen: v7x
topology: tpu7x:2x2x1
jax: 0.10.0
libtpu: 0.0.40
codegen_flags: <defaults>
</compile_context>

<pallas_src>
import functools

import numpy as np
import jax
import jax.numpy as jnp
from jax.experimental import pallas as pl
from jax.experimental.pallas import tpu as pltpu


# ----------------------------------------------------------------------------
# Pallas kernel: fused normalize + trilinear grid_sample (border padding)
# ----------------------------------------------------------------------------
def _voxel_grid_sample_kernel(params_ref, pts_ref, ez_ref, ey_ref, vol_ref,
                              out_ref, *, D, H, W, C, TP):
    DH = D * H

    # params (SMEM f32[6]): voxel-index affine  i_k = clip(a_k * coord_k + b_k, 0, dim_k-1)
    ax, bx = params_ref[0], params_ref[1]
    ay, by = params_ref[2], params_ref[3]
    az, bz = params_ref[4], params_ref[5]

    # points arrive transposed & sublane-padded: coordinate k is row k of (8, TP).
    px = pts_ref[0:1, :]
    py = pts_ref[1:2, :]
    pz = pts_ref[2:3, :]

    ix = jnp.clip(ax * px + bx, 0.0, float(W - 1))
    iy = jnp.clip(ay * py + by, 0.0, float(H - 1))
    iz = jnp.clip(az * pz + bz, 0.0, float(D - 1))

    x0f = jnp.floor(ix); tx = ix - x0f
    y0f = jnp.floor(iy); ty = iy - y0f
    z0f = jnp.floor(iz); tz = iz - z0f

    x0 = x0f.astype(jnp.int32); x1 = jnp.minimum(x0 + 1, W - 1)
    y0 = y0f.astype(jnp.int32); y1 = jnp.minimum(y0 + 1, H - 1)
    z0 = z0f.astype(jnp.int32); z1 = jnp.minimum(z0 + 1, D - 1)

    # --- Small per-axis weighted one-hots (2 compare/select passes each, on
    # (D,TP) / (H,TP) / (W,TP) instead of 4 passes over (D*H, TP)).
    # Border collapse (c0 == c1) correctly yields weight (1-t) + t = 1.
    rz = jax.lax.broadcasted_iota(jnp.int32, (D, TP), 0)
    Sz = jnp.where(rz == z0, 1.0 - tz, 0.0) + jnp.where(rz == z1, tz, 0.0)   # (D, TP)
    ry = jax.lax.broadcasted_iota(jnp.int32, (H, TP), 0)
    Sy = jnp.where(ry == y0, 1.0 - ty, 0.0) + jnp.where(ry == y1, ty, 0.0)   # (H, TP)
    rx = jax.lax.broadcasted_iota(jnp.int32, (W, TP), 0)
    Sx = jnp.where(rx == x0, 1.0 - tx, 0.0) + jnp.where(rx == x1, tx, 0.0)   # (W, TP)

    # --- Expand Sz / Sy to the fused (z*H + y) contraction axis via constant
    # 0/1 expansion matrices on the MXU, then one elementwise product:
    #   S[z*H + y, p] = Sz[z, p] * Sy[y, p]   (bilinear (z,y) corner weights).
    S = (jnp.dot(ez_ref[...], Sz, preferred_element_type=jnp.float32) *
         jnp.dot(ey_ref[...], Sy, preferred_element_type=jnp.float32))       # (DH, TP)

    # --- Main contraction: (W*C, DH) @ (DH, TP) -> (W*C, TP).
    # Row x*C + c is the (z, y)-interpolated value of channel c in voxel
    # column x, for every point in the tile.
    M = jnp.dot(vol_ref[...], S, preferred_element_type=jnp.float32)

    # --- x-direction lerp on the VPU: W static, sublane-aligned (C, TP)
    # slices, with the precomputed Sx weight table (no per-iteration compares).
    acc = jnp.zeros((C, TP), jnp.float32)
    for x in range(W):
        acc = acc + Sx[x:x + 1, :] * M[x * C:(x + 1) * C, :]

    out_ref[...] = acc                                     # (C, TP): lane-dense store


# ----------------------------------------------------------------------------
# Module wrapper (mirrors VoxelMemory)
# ----------------------------------------------------------------------------
class VoxelMemoryPallas:
    def __init__(self, v_shape, offset, scale, ratio_dim, ratio,
                 init_std=1e-4, *, key=None, point_tile=2048):
        assert len(v_shape) == 5 and int(v_shape[0]) == 1, v_shape
        _, C, D, H, W = (int(s) for s in v_shape)
        self.C, self.D, self.H, self.W = C, D, H, W
        self.point_tile = int(point_tile)          # upper cap on the point tile

        if key is None:
            key = jax.random.PRNGKey(0)
        # nn.Parameter(torch.randn(*v_shape) * init_std)
        self.voxel = jax.random.normal(key, (1, C, D, H, W), jnp.float32) * init_std

        self.offset = jnp.asarray(offset, jnp.float32).reshape(-1)[:3]
        self.scale = jnp.asarray(scale, jnp.float32).reshape(())
        self.ratio = jnp.asarray(ratio, jnp.float32).reshape(())
        self.ratio_dim = int(ratio_dim)

        # Voxel as a (W*C, D*H) matrix: row = x*C + c, col = z*H + y.
        self.vol_flat = jnp.transpose(self.voxel[0], (3, 0, 1, 2)).reshape(W * C, D * H)

        # Constant 0/1 expansion matrices for the separable (z, y) one-hot:
        #   Ez[z*H + y, z] = 1,  Ey[z*H + y, y] = 1.
        r = np.arange(D * H)
        ez = np.zeros((D * H, D), np.float32); ez[r, r // H] = 1.0
        ey = np.zeros((D * H, H), np.float32); ey[r, r % H] = 1.0
        self.ez = jnp.asarray(ez)
        self.ey = jnp.asarray(ey)

        # Fold normalize() + grid_sample index transform into one affine per coord:
        #   i_k = clip(a_k * coord_k + b_k, 0, dim_k - 1)
        rr = jnp.ones((3,), jnp.float32).at[self.ratio_dim].set(self.ratio)
        dims_m1 = jnp.asarray([W - 1, H - 1, D - 1], jnp.float32)
        a = rr / self.scale * 0.5 * dims_m1
        b = 0.5 * dims_m1 - self.offset * a
        self.params = jnp.stack([a[0], b[0], a[1], b[1], a[2], b[2]]).astype(jnp.float32)

    @staticmethod
    def _pick_tile(P, cap):
        # Multiple of 512 lanes, capped for VMEM, and sized so the grid keeps
        # >=4 steps when P is large enough (v7x: 2 TensorCores to feed).
        quarter = -(-P // 4)
        tp = ((quarter + 511) // 512) * 512
        return int(min(cap, max(512, tp)))

    def forward(self, xc, mode="bilinear"):
        # TODO(synk): only mode='bilinear' (trilinear) is implemented; 'nearest' is not.
        assert mode == "bilinear"
        shape = xc.shape
        pts = xc.reshape(-1, 3).astype(jnp.float32)
        P = pts.shape[0]
        TP = self._pick_tile(P, self.point_tile)
        P_pad = ((P + TP - 1) // TP) * TP

        # (8, P_pad): 3 coordinate rows + 5 zero rows so each per-step tile is a
        # full 8-sublane slab; points along lanes (lane-dense).
        # TODO(synk): callers that already hold points/features in (3, P)/(C, P)
        # layout can skip this pad/transpose and the one on the output.
        pts_t = jnp.pad(pts, ((0, P_pad - P), (0, 5))).T

        D, H, W, C = self.D, self.H, self.W, self.C
        DH, CW = D * H, C * W
        kernel = functools.partial(_voxel_grid_sample_kernel, D=D, H=H, W=W, C=C, TP=TP)

        cost = pl.CostEstimate(
            flops=2 * P_pad * (CW * DH + DH * (D + H) + C * W),
            transcendentals=0,
            bytes_accessed=4 * (8 * P_pad + C * P_pad + CW * DH + DH * (D + H) + 6),
        )

        out = pl.pallas_call(
            kernel,
            out_shape=jax.ShapeDtypeStruct((C, P_pad), jnp.float32),
            grid=(P_pad // TP,),
            in_specs=[
                pl.BlockSpec(memory_space=pltpu.MemorySpace.SMEM),   # affine params f32[6]
                pl.BlockSpec((8, TP), lambda i: (0, i)),             # point tile (8, TP)
                pl.BlockSpec((DH, D), lambda i: (0, 0)),             # Ez expansion (resident)
                pl.BlockSpec((DH, H), lambda i: (0, 0)),             # Ey expansion (resident)
                pl.BlockSpec((CW, DH), lambda i: (0, 0)),            # voxel matrix (resident)
            ],
            out_specs=pl.BlockSpec((C, TP), lambda i: (0, i)),
            compiler_params=pltpu.CompilerParams(
                dimension_semantics=("parallel",),
                vmem_limit_bytes=32 * 1024 * 1024,
            ),
            cost_estimate=cost,
        )(self.params, pts_t, self.ez, self.ey, self.vol_flat)

        return out[:, :P].T.reshape(*shape[:-1], C)


# ----------------------------------------------------------------------------
# Plain-JAX reference of the same grid_sample semantics (for verification)
# ----------------------------------------------------------------------------
def reference_forward(mem, xc):
    D, H, W, C = mem.D, mem.H, mem.W, mem.C
    pts = xc.reshape(-1, 3).astype(jnp.float32)
    n = (pts - mem.offset) / mem.scale
    n = n.at[:, mem.ratio_dim].multiply(mem.ratio)
    ix = jnp.clip((n[:, 0] + 1.0) * 0.5 * (W - 1), 0.0, float(W - 1))
    iy = jnp.clip((n[:, 1] + 1.0) * 0.5 * (H - 1), 0.0, float(H - 1))
    iz = jnp.clip((n[:, 2] + 1.0) * 0.5 * (D - 1), 0.0, float(D - 1))
    x0 = jnp.floor(ix).astype(jnp.int32); x1 = jnp.minimum(x0 + 1, W - 1)
    y0 = jnp.floor(iy).astype(jnp.int32); y1 = jnp.minimum(y0 + 1, H - 1)
    z0 = jnp.floor(iz).astype(jnp.int32); z1 = jnp.minimum(z0 + 1, D - 1)
    tx = ix - x0; ty = iy - y0; tz = iz - z0
    vol = jnp.transpose(mem.voxel[0].reshape(C, D * H * W))     # (V, C), row = z*H*W + y*W + x
    out = jnp.zeros((pts.shape[0], C), jnp.float32)
    for zi, wz in ((z0, 1.0 - tz), (z1, tz)):
        for yi, wy in ((y0, 1.0 - ty), (y1, ty)):
            for xi, wx in ((x0, 1.0 - tx), (x1, tx)):
                idx = zi * (H * W) + yi * W + xi
                out = out + (wz * wy * wx)[:, None] * vol[idx]
    return out.reshape(*xc.shape[:-1], C)


if __name__ == "__main__":
    key = jax.random.PRNGKey(0)
    k_vox, k_pts = jax.random.split(key)

    C, D, H, W = 16, 8, 16, 16
    offset = jnp.asarray([0.05, -0.10, 0.20], jnp.float32)
    scale = jnp.asarray(0.9, jnp.float32)
    ratio = jnp.asarray(2.0, jnp.float32)

    mem = VoxelMemoryPallas((1, C, D, H, W), offset, scale, ratio_dim=-1,
                            ratio=ratio, init_std=0.05, key=k_vox)

    xc = jax.random.normal(k_pts, (2, 300, 3), jnp.float32) * 0.6
    out = jax.block_until_ready(mem.forward(xc))

    assert out.shape == (2, 300, C), out.shape
    ref = reference_forward(mem, xc)
    # Tolerance allows for the MXU's default-precision f32 contraction path.
    assert np.allclose(np.asarray(out), np.asarray(ref), atol=2e-3, rtol=2e-3), (
        float(jnp.max(jnp.abs(out - ref))))

    print("KERNEL_OK")
</pallas_src>

<mosaic_0001>
module attributes {stable_mosaic.version = 11 : i64} {
  func.func @_voxel_grid_sample_kernel(%arg0: i32, %arg1: memref<6xf32, #tpu.memory_space<smem>>, %arg2: memref<8x512xf32, #tpu.memory_space<vmem>>, %arg3: memref<128x8xf32, #tpu.memory_space<vmem>>, %arg4: memref<128x16xf32, #tpu.memory_space<vmem>>, %arg5: memref<256x128xf32, #tpu.memory_space<vmem>>, %arg6: memref<16x512xf32, #tpu.memory_space<vmem>>) attributes {dimension_semantics = [#tpu.dimension_semantics<parallel>], iteration_bounds = array<i64: 2>, scalar_prefetch = 0 : i64, scratch_operands = 0 : i64, tpu.core_type = #tpu.core_type<tc>, window_params = [{transform_indices = @transform_0, window_bounds = array<i64: 6>}, {transform_indices = @transform_1, window_bounds = array<i64: 8, 512>}, {pipeline_mode = #tpu.pipeline_mode<synchronous>, transform_indices = @transform_2, window_bounds = array<i64: 128, 8>}, {pipeline_mode = #tpu.pipeline_mode<synchronous>, transform_indices = @transform_3, window_bounds = array<i64: 128, 16>}, {pipeline_mode = #tpu.pipeline_mode<synchronous>, transform_indices = @transform_4, window_bounds = array<i64: 256, 128>}, {transform_indices = @transform_5, window_bounds = array<i64: 16, 512>}]} {
    %c0 = arith.constant 0 : index
    %0 = memref.load %arg1[%c0] : memref<6xf32, #tpu.memory_space<smem>>
    %c1 = arith.constant 1 : index
    %1 = memref.load %arg1[%c1] : memref<6xf32, #tpu.memory_space<smem>>
    %c2 = arith.constant 2 : index
    %2 = memref.load %arg1[%c2] : memref<6xf32, #tpu.memory_space<smem>>
    %c3 = arith.constant 3 : index
    %3 = memref.load %arg1[%c3] : memref<6xf32, #tpu.memory_space<smem>>
    %c4 = arith.constant 4 : index
    %4 = memref.load %arg1[%c4] : memref<6xf32, #tpu.memory_space<smem>>
    %c5 = arith.constant 5 : index
    %5 = memref.load %arg1[%c5] : memref<6xf32, #tpu.memory_space<smem>>
    %c0_0 = arith.constant 0 : index
    %c0_1 = arith.constant 0 : index
    %6 = vector.load %arg2[%c0_0, %c0_1] : memref<8x512xf32, #tpu.memory_space<vmem>>, vector<1x512xf32>
    %c1_2 = arith.constant 1 : index
    %c0_3 = arith.constant 0 : index
    %7 = vector.load %arg2[%c1_2, %c0_3] : memref<8x512xf32, #tpu.memory_space<vmem>>, vector<1x512xf32>
    %c2_4 = arith.constant 2 : index
    %c0_5 = arith.constant 0 : index
    %8 = vector.load %arg2[%c2_4, %c0_5] : memref<8x512xf32, #tpu.memory_space<vmem>>, vector<1x512xf32>
    %9 = vector.broadcast %0 : f32 to vector<1x512xf32>
    %10 = arith.mulf %9, %6 : vector<1x512xf32>
    %11 = vector.broadcast %1 : f32 to vector<1x512xf32>
    %12 = arith.addf %10, %11 : vector<1x512xf32>
    %cst = arith.constant 0.000000e+00 : f32
    %cst_6 = arith.constant 1.500000e+01 : f32
    %13 = vector.broadcast %cst : f32 to vector<1x512xf32>
    %14 = arith.maximumf %13, %12 : vector<1x512xf32>
    %15 = vector.broadcast %cst_6 : f32 to vector<1x512xf32>
    %16 = arith.minimumf %15, %14 : vector<1x512xf32>
    %17 = vector.broadcast %2 : f32 to vector<1x512xf32>
    %18 = arith.mulf %17, %7 : vector<1x512xf32>
    %19 = vector.broadcast %3 : f32 to vector<1x512xf32>
    %20 = arith.addf %18, %19 : vector<1x512xf32>
    %cst_7 = arith.constant 0.000000e+00 : f32
    %cst_8 = arith.constant 1.500000e+01 : f32
    %21 = vector.broadcast %cst_7 : f32 to vector<1x512xf32>
    %22 = arith.maximumf %21, %20 : vector<1x512xf32>
    %23 = vector.broadcast %cst_8 : f32 to vector<1x512xf32>
    %24 = arith.minimumf %23, %22 : vector<1x512xf32>
    %25 = vector.broadcast %4 : f32 to vector<1x512xf32>
    %26 = arith.mulf %25, %8 : vector<1x512xf32>
    %27 = vector.broadcast %5 : f32 to vector<1x512xf32>
    %28 = arith.addf %26, %27 : vector<1x512xf32>
    %cst_9 = arith.constant 0.000000e+00 : f32
    %cst_10 = arith.constant 7.000000e+00 : f32
    %29 = vector.broadcast %cst_9 : f32 to vector<1x512xf32>
    %30 = arith.maximumf %29, %28 : vector<1x512xf32>
    %31 = vector.broadcast %cst_10 : f32 to vector<1x512xf32>
    %32 = arith.minimumf %31, %30 : vector<1x512xf32>
    %33 = math.floor %16 : vector<1x512xf32>
    %34 = arith.subf %16, %33 : vector<1x512xf32>
    %35 = math.floor %24 : vector<1x512xf32>
    %36 = arith.subf %24, %35 : vector<1x512xf32>
    %37 = math.floor %32 : vector<1x512xf32>
    %38 = arith.subf %32, %37 : vector<1x512xf32>
    %39 = arith.fptosi %33 : vector<1x512xf32> to vector<1x512xi32>
    %c1_i32 = arith.constant 1 : i32
    %40 = vector.broadcast %c1_i32 : i32 to vector<1x512xi32>
    %41 = arith.addi %39, %40 : vector<1x512xi32>
    %c15_i32 = arith.constant 15 : i32
    %42 = vector.broadcast %c15_i32 : i32 to vector<1x512xi32>
    %43 = arith.minsi %41, %42 : vector<1x512xi32>
    %44 = arith.fptosi %35 : vector<1x512xf32> to vector<1x512xi32>
    %c1_i32_11 = arith.constant 1 : i32
    %45 = vector.broadcast %c1_i32_11 : i32 to vector<1x512xi32>
    %46 = arith.addi %44, %45 : vector<1x512xi32>
    %c15_i32_12 = arith.constant 15 : i32
    %47 = vector.broadcast %c15_i32_12 : i32 to vector<1x512xi32>
    %48 = arith.minsi %46, %47 : vector<1x512xi32>
    %49 = arith.fptosi %37 : vector<1x512xf32> to vector<1x512xi32>
    %c1_i32_13 = arith.constant 1 : i32
    %50 = vector.broadcast %c1_i32_13 : i32 to vector<1x512xi32>
    %51 = arith.addi %49, %50 : vector<1x512xi32>
    %c7_i32 = arith.constant 7 : i32
    %52 = vector.broadcast %c7_i32 : i32 to vector<1x512xi32>
    %53 = arith.minsi %51, %52 : vector<1x512xi32>
    %54 = tpu.iota {dimensions = array<i32: 0>} : vector<8x512xi32>
    %55 = vector.broadcast %49 : vector<1x512xi32> to vector<8x512xi32>
    %56 = arith.cmpi eq, %54, %55 : vector<8x512xi32>
    %cst_14 = arith.constant 1.000000e+00 : f32
    %57 = vector.broadcast %cst_14 : f32 to vector<1x512xf32>
    %58 = arith.subf %57, %38 : vector<1x512xf32>
    %cst_15 = arith.constant 0.000000e+00 : f32
    %59 = vector.shape_cast %58 : vector<1x512xf32> to vector<1x512xf32>
    %60 = vector.broadcast %59 : vector<1x512xf32> to vector<8x512xf32>
    %61 = vector.broadcast %cst_15 : f32 to vector<8x512xf32>
    %62 = arith.select %56, %60, %61 : vector<8x512xi1>, vector<8x512xf32>
    %63 = vector.broadcast %53 : vector<1x512xi32> to vector<8x512xi32>
    %64 = arith.cmpi eq, %54, %63 : vector<8x512xi32>
    %cst_16 = arith.constant 0.000000e+00 : f32
    %65 = vector.shape_cast %38 : vector<1x512xf32> to vector<1x512xf32>
    %66 = vector.broadcast %65 : vector<1x512xf32> to vector<8x512xf32>
    %67 = vector.broadcast %cst_16 : f32 to vector<8x512xf32>
    %68 = arith.select %64, %66, %67 : vector<8x512xi1>, vector<8x512xf32>
    %69 = arith.addf %62, %68 : vector<8x512xf32>
    %70 = tpu.iota {dimensions = array<i32: 0>} : vector<16x512xi32>
    %71 = vector.broadcast %44 : vector<1x512xi32> to vector<16x512xi32>
    %72 = arith.cmpi eq, %70, %71 : vector<16x512xi32>
    %cst_17 = arith.constant 1.000000e+00 : f32
    %73 = vector.broadcast %cst_17 : f32 to vector<1x512xf32>
    %74 = arith.subf %73, %36 : vector<1x512xf32>
    %cst_18 = arith.constant 0.000000e+00 : f32
    %75 = vector.shape_cast %74 : vector<1x512xf32> to vector<1x512xf32>
    %76 = vector.broadcast %75 : vector<1x512xf32> to vector<16x512xf32>
    %77 = vector.broadcast %cst_18 : f32 to vector<16x512xf32>
    %78 = arith.select %72, %76, %77 : vector<16x512xi1>, vector<16x512xf32>
    %79 = vector.broadcast %48 : vector<1x512xi32> to vector<16x512xi32>
    %80 = arith.cmpi eq, %70, %79 : vector<16x512xi32>
    %cst_19 = arith.constant 0.000000e+00 : f32
    %81 = vector.shape_cast %36 : vector<1x512xf32> to vector<1x512xf32>
    %82 = vector.broadcast %81 : vector<1x512xf32> to vector<16x512xf32>
    %83 = vector.broadcast %cst_19 : f32 to vector<16x512xf32>
    %84 = arith.select %80, %82, %83 : vector<16x512xi1>, vector<16x512xf32>
    %85 = arith.addf %78, %84 : vector<16x512xf32>
    %86 = tpu.iota {dimensions = array<i32: 0>} : vector<16x512xi32>
    %87 = vector.broadcast %39 : vector<1x512xi32> to vector<16x512xi32>
    %88 = arith.cmpi eq, %86, %87 : vector<16x512xi32>
    %cst_20 = arith.constant 1.000000e+00 : f32
    %89 = vector.broadcast %cst_20 : f32 to vector<1x512xf32>
    %90 = arith.subf %89, %34 : vector<1x512xf32>
    %cst_21 = arith.constant 0.000000e+00 : f32
    %91 = vector.shape_cast %90 : vector<1x512xf32> to vector<1x512xf32>
    %92 = vector.broadcast %91 : vector<1x512xf32> to vector<16x512xf32>
    %93 = vector.broadcast %cst_21 : f32 to vector<16x512xf32>
    %94 = arith.select %88, %92, %93 : vector<16x512xi1>, vector<16x512xf32>
    %95 = vector.broadcast %43 : vector<1x512xi32> to vector<16x512xi32>
    %96 = arith.cmpi eq, %86, %95 : vector<16x512xi32>
    %cst_22 = arith.constant 0.000000e+00 : f32
    %97 = vector.shape_cast %34 : vector<1x512xf32> to vector<1x512xf32>
    %98 = vector.broadcast %97 : vector<1x512xf32> to vector<16x512xf32>
    %99 = vector.broadcast %cst_22 : f32 to vector<16x512xf32>
    %100 = arith.select %96, %98, %99 : vector<16x512xi1>, vector<16x512xf32>
    %101 = arith.addf %94, %100 : vector<16x512xf32>
    %c0_23 = arith.constant 0 : index
    %c0_24 = arith.constant 0 : index
    %102 = vector.load %arg3[%c0_23, %c0_24] : memref<128x8xf32, #tpu.memory_space<vmem>>, vector<128x8xf32>
    %cst_25 = arith.constant dense<0.000000e+00> : vector<128x512xf32>
    %103 = tpu.matmul %102, %69, %cst_25 {dimension_numbers = #tpu.dot_dimension_numbers<[1], [0], [0], [1], [0, 0, 1, 1], [], []>} : vector<128x8xf32>, vector<8x512xf32>, vector<128x512xf32> -> vector<128x512xf32>
    %c0_26 = arith.constant 0 : index
    %c0_27 = arith.constant 0 : index
    %104 = vector.load %arg4[%c0_26, %c0_27] : memref<128x16xf32, #tpu.memory_space<vmem>>, vector<128x16xf32>
    %cst_28 = arith.constant dense<0.000000e+00> : vector<128x512xf32>
    %105 = tpu.matmul %104, %85, %cst_28 {dimension_numbers = #tpu.dot_dimension_numbers<[1], [0], [0], [1], [0, 0, 1, 1], [], []>} : vector<128x16xf32>, vector<16x512xf32>, vector<128x512xf32> -> vector<128x512xf32>
    %106 = arith.mulf %103, %105 : vector<128x512xf32>
    %c0_29 = arith.constant 0 : index
    %c0_30 = arith.constant 0 : index
    %107 = vector.load %arg5[%c0_29, %c0_30] : memref<256x128xf32, #tpu.memory_space<vmem>>, vector<256x128xf32>
    %cst_31 = arith.constant dense<0.000000e+00> : vector<256x512xf32>
    %108 = tpu.matmul %107, %106, %cst_31 {dimension_numbers = #tpu.dot_dimension_numbers<[1], [0], [0], [1], [0, 0, 1, 1], [], []>} : vector<256x128xf32>, vector<128x512xf32>, vector<256x512xf32> -> vector<256x512xf32>
    %cst_32 = arith.constant 0.000000e+00 : f32
    %109 = vector.broadcast %cst_32 : f32 to vector<16x512xf32>
    %110 = vector.extract_strided_slice %101 {offsets = [0, 0], sizes = [1, 512], strides = [1, 1]} : vector<16x512xf32> to vector<1x512xf32>
    %111 = vector.extract_strided_slice %108 {offsets = [0, 0], sizes = [16, 512], strides = [1, 1]} : vector<256x512xf32> to vector<16x512xf32>
    %112 = vector.broadcast %110 : vector<1x512xf32> to vector<16x512xf32>
    %113 = arith.mulf %112, %111 : vector<16x512xf32>
    %114 = arith.addf %109, %113 : vector<16x512xf32>
    %115 = vector.extract_strided_slice %101 {offsets = [1, 0], sizes = [1, 512], strides = [1, 1]} : vector<16x512xf32> to vector<1x512xf32>
    %116 = vector.extract_strided_slice %108 {offsets = [16, 0], sizes = [16, 512], strides = [1, 1]} : vector<256x512xf32> to vector<16x512xf32>
    %117 = vector.broadcast %115 : vector<1x512xf32> to vector<16x512xf32>
    %118 = arith.mulf %117, %116 : vector<16x512xf32>
    %119 = arith.addf %114, %118 : vector<16x512xf32>
    %120 = vector.extract_strided_slice %101 {offsets = [2, 0], sizes = [1, 512], strides = [1, 1]} : vector<16x512xf32> to vector<1x512xf32>
    %121 = vector.extract_strided_slice %108 {offsets = [32, 0], sizes = [16, 512], strides = [1, 1]} : vector<256x512xf32> to vector<16x512xf32>
    %122 = vector.broadcast %120 : vector<1x512xf32> to vector<16x512xf32>
    %123 = arith.mulf %122, %121 : vector<16x512xf32>
    %124 = arith.addf %119, %123 : vector<16x512xf32>
    %125 = vector.extract_strided_slice %101 {offsets = [3, 0], sizes = [1, 512], strides = [1, 1]} : vector<16x512xf32> to vector<1x512xf32>
    %126 = vector.extract_strided_slice %108 {offsets = [48, 0], sizes = [16, 512], strides = [1, 1]} : vector<256x512xf32> to vector<16x512xf32>
    %127 = vector.broadcast %125 : vector<1x512xf32> to vector<16x512xf32>
    %128 = arith.mulf %127, %126 : vector<16x512xf32>
    %129 = arith.addf %124, %128 : vector<16x512xf32>
    %130 = vector.extract_strided_slice %101 {offsets = [4, 0], sizes = [1, 512], strides = [1, 1]} : vector<16x512xf32> to vector<1x512xf32>
    %131 = vector.extract_strided_slice %108 {offsets = [64, 0], sizes = [16, 512], strides = [1, 1]} : vector<256x512xf32> to vector<16x512xf32>
    %132 = vector.broadcast %130 : vector<1x512xf32> to vector<16x512xf32>
    %133 = arith.mulf %132, %131 : vector<16x512xf32>
    %134 = arith.addf %129, %133 : vector<16x512xf32>
    %135 = vector.extract_strided_slice %101 {offsets = [5, 0], sizes = [1, 512], strides = [1, 1]} : vector<16x512xf32> to vector<1x512xf32>
    %136 = vector.extract_strided_slice %108 {offsets = [80, 0], sizes = [16, 512], strides = [1, 1]} : vector<256x512xf32> to vector<16x512xf32>
    %137 = vector.broadcast %135 : vector<1x512xf32> to vector<16x512xf32>
    %138 = arith.mulf %137, %136 : vector<16x512xf32>
    %139 = arith.addf %134, %138 : vector<16x512xf32>
    %140 = vector.extract_strided_slice %101 {offsets = [6, 0], sizes = [1, 512], strides = [1, 1]} : vector<16x512xf32> to vector<1x512xf32>
    %141 = vector.extract_strided_slice %108 {offsets = [96, 0], sizes = [16, 512], strides = [1, 1]} : vector<256x512xf32> to vector<16x512xf32>
    %142 = vector.broadcast %140 : vector<1x512xf32> to vector<16x512xf32>
    %143 = arith.mulf %142, %141 : vector<16x512xf32>
    %144 = arith.addf %139, %143 : vector<16x512xf32>
    %145 = vector.extract_strided_slice %101 {offsets = [7, 0], sizes = [1, 512], strides = [1, 1]} : vector<16x512xf32> to vector<1x512xf32>
    %146 = vector.extract_strided_slice %108 {offsets = [112, 0], sizes = [16, 512], strides = [1, 1]} : vector<256x512xf32> to vector<16x512xf32>
    %147 = vector.broadcast %145 : vector<1x512xf32> to vector<16x512xf32>
    %148 = arith.mulf %147, %146 : vector<16x512xf32>
    %149 = arith.addf %144, %148 : vector<16x512xf32>
    %150 = vector.extract_strided_slice %101 {offsets = [8, 0], sizes = [1, 512], strides = [1, 1]} : vector<16x512xf32> to vector<1x512xf32>
    %151 = vector.extract_strided_slice %108 {offsets = [128, 0], sizes = [16, 512], strides = [1, 1]} : vector<256x512xf32> to vector<16x512xf32>
    %152 = vector.broadcast %150 : vector<1x512xf32> to vector<16x512xf32>
    %153 = arith.mulf %152, %151 : vector<16x512xf32>
    %154 = arith.addf %149, %153 : vector<16x512xf32>
    %155 = vector.extract_strided_slice %101 {offsets = [9, 0], sizes = [1, 512], strides = [1, 1]} : vector<16x512xf32> to vector<1x512xf32>
    %156 = vector.extract_strided_slice %108 {offsets = [144, 0], sizes = [16, 512], strides = [1, 1]} : vector<256x512xf32> to vector<16x512xf32>
    %157 = vector.broadcast %155 : vector<1x512xf32> to vector<16x512xf32>
    %158 = arith.mulf %157, %156 : vector<16x512xf32>
    %159 = arith.addf %154, %158 : vector<16x512xf32>
    %160 = vector.extract_strided_slice %101 {offsets = [10, 0], sizes = [1, 512], strides = [1, 1]} : vector<16x512xf32> to vector<1x512xf32>
    %161 = vector.extract_strided_slice %108 {offsets = [160, 0], sizes = [16, 512], strides = [1, 1]} : vector<256x512xf32> to vector<16x512xf32>
    %162 = vector.broadcast %160 : vector<1x512xf32> to vector<16x512xf32>
    %163 = arith.mulf %162, %161 : vector<16x512xf32>
    %164 = arith.addf %159, %163 : vector<16x512xf32>
    %165 = vector.extract_strided_slice %101 {offsets = [11, 0], sizes = [1, 512], strides = [1, 1]} : vector<16x512xf32> to vector<1x512xf32>
    %166 = vector.extract_strided_slice %108 {offsets = [176, 0], sizes = [16, 512], strides = [1, 1]} : vector<256x512xf32> to vector<16x512xf32>
    %167 = vector.broadcast %165 : vector<1x512xf32> to vector<16x512xf32>
    %168 = arith.mulf %167, %166 : vector<16x512xf32>
    %169 = arith.addf %164, %168 : vector<16x512xf32>
    %170 = vector.extract_strided_slice %101 {offsets = [12, 0], sizes = [1, 512], strides = [1, 1]} : vector<16x512xf32> to vector<1x512xf32>
    %171 = vector.extract_strided_slice %108 {offsets = [192, 0], sizes = [16, 512], strides = [1, 1]} : vector<256x512xf32> to vector<16x512xf32>
    %172 = vector.broadcast %170 : vector<1x512xf32> to vector<16x512xf32>
    %173 = arith.mulf %172, %171 : vector<16x512xf32>
    %174 = arith.addf %169, %173 : vector<16x512xf32>
    %175 = vector.extract_strided_slice %101 {offsets = [13, 0], sizes = [1, 512], strides = [1, 1]} : vector<16x512xf32> to vector<1x512xf32>
    %176 = vector.extract_strided_slice %108 {offsets = [208, 0], sizes = [16, 512], strides = [1, 1]} : vector<256x512xf32> to vector<16x512xf32>
    %177 = vector.broadcast %175 : vector<1x512xf32> to vector<16x512xf32>
    %178 = arith.mulf %177, %176 : vector<16x512xf32>
    %179 = arith.addf %174, %178 : vector<16x512xf32>
    %180 = vector.extract_strided_slice %101 {offsets = [14, 0], sizes = [1, 512], strides = [1, 1]} : vector<16x512xf32> to vector<1x512xf32>
    %181 = vector.extract_strided_slice %108 {offsets = [224, 0], sizes = [16, 512], strides = [1, 1]} : vector<256x512xf32> to vector<16x512xf32>
    %182 = vector.broadcast %180 : vector<1x512xf32> to vector<16x512xf32>
    %183 = arith.mulf %182, %181 : vector<16x512xf32>
    %184 = arith.addf %179, %183 : vector<16x512xf32>
    %185 = vector.extract_strided_slice %101 {offsets = [15, 0], sizes = [1, 512], strides = [1, 1]} : vector<16x512xf32> to vector<1x512xf32>
    %186 = vector.extract_strided_slice %108 {offsets = [240, 0], sizes = [16, 512], strides = [1, 1]} : vector<256x512xf32> to vector<16x512xf32>
    %187 = vector.broadcast %185 : vector<1x512xf32> to vector<16x512xf32>
    %188 = arith.mulf %187, %186 : vector<16x512xf32>
    %189 = arith.addf %184, %188 : vector<16x512xf32>
    %c0_33 = arith.constant 0 : index
    %c0_34 = arith.constant 0 : index
    %190 = vector.load %arg6[%c0_33, %c0_34] : memref<16x512xf32, #tpu.memory_space<vmem>>, vector<16x512xf32>
    tpu.vector_store %arg6[%c0_33, %c0_34], %189 {strides = array<i32>} : memref<16x512xf32, #tpu.memory_space<vmem>>, vector<16x512xf32>,
    return
  }
  func.func @transform_0(%arg0: i32) -> i32 {
    %c0_i32 = arith.constant 0 : i32
    %c0_i32_0 = arith.constant 0 : i32
    return %c0_i32 : i32
  }
  func.func @transform_1(%arg0: i32) -> (i32, i32) {
    %c0_i32 = arith.constant 0 : i32
    %c0_i32_0 = arith.constant 0 : i32
    return %c0_i32, %arg0 : i32, i32
  }
  func.func @transform_2(%arg0: i32) -> (i32, i32) {
    %c0_i32 = arith.constant 0 : i32
    %c0_i32_0 = arith.constant 0 : i32
    %c0_i32_1 = arith.constant 0 : i32
    return %c0_i32, %c0_i32_0 : i32, i32
  }
  func.func @transform_3(%arg0: i32) -> (i32, i32) {
    %c0_i32 = arith.constant 0 : i32
    %c0_i32_0 = arith.constant 0 : i32
    %c0_i32_1 = arith.constant 0 : i32
    return %c0_i32, %c0_i32_0 : i32, i32
  }
  func.func @transform_4(%arg0: i32) -> (i32, i32) {
    %c0_i32 = arith.constant 0 : i32
    %c0_i32_0 = arith.constant 0 : i32
    %c0_i32_1 = arith.constant 0 : i32
    return %c0_i32, %c0_i32_0 : i32, i32
  }
  func.func @transform_5(%arg0: i32) -> (i32, i32) {
    %c0_i32 = arith.constant 0 : i32
    %c0_i32_0 = arith.constant 0 : i32
    return %c0_i32, %arg0 : i32, i32
  }
}

</mosaic_0001>

<llo_original>
// kernel: tpu_custom_call.1
$region0: #{tpu_custom_call.1}
  #allocation0 [shape = 'u32[]', space=smem, size = 0x4, offset = 0x4, fixed_abs, tag = 'smem constant byte address 0x4 - core index']
  #allocation1 [shape = 'u32[144,128]{1,0:T(1,128)}', space=vmem, size = 0x12000, scoped, tag = 'internal scratch']
  %s0 = inlined_call_operand.vmem [shape: f32[6], index: 0, kind: input, shape index: {}]
  %s1 = inlined_call_operand.hbm [shape: f32[8,1024], index: 1, kind: input, shape index: {}]
  %s2 = inlined_call_operand.vmem [shape: f32[128,8], index: 2, kind: input, shape index: {}]
  %s3 = inlined_call_operand.vmem [shape: f32[128,16], index: 3, kind: input, shape index: {}]
  %s4 = inlined_call_operand.vmem [shape: f32[256,128], index: 4, kind: input, shape index: {}]
  %s5 = inlined_call_operand.hbm [shape: f32[16,1024], index: 5, kind: output, shape index: {}]
  %s6 = sld [smem:[#allocation0]]
  $region61: #{tpu_custom_call.1} parent=0
    _
  %s8 = ssub.s32 1, %s6
  %s9 = scalar_select 0, %s8, %s6
  $region1: #{tpu_custom_call.1} parent=0
    #allocation2 [shape = 'u8[512]{0}', space=smem, size = 0x200, scoped, tag = 'input window, operand 0, single buffered']
    #allocation3 [shape = 's32[2]{0}', space=sflag, size = 0x8, scoped, tag = 'scoped memory for tpu_custom_call.1']
    #allocation4 [shape = 's32[2]{0}', space=sflag, size = 0x8, scoped, tag = 'scoped memory for tpu_custom_call.1']
    #allocation5 [shape = 's32[2]{0}', space=sflag, size = 0x8, scoped, tag = 'scoped memory for tpu_custom_call.1']
    #allocation6 [shape = 'u8[32768]{0}', space=vmem, size = 0x8000, scoped, tag = 'input window, operand 1']
    #allocation7 [shape = 'u8[65536]{0}', space=vmem, size = 0x10000, scoped, tag = 'output window, operand 0']
    %10 = vsyncpa [#allocation5], 0
    %11 = vsyncpa [#allocation3], 0
    %s12 = scalar_lea.sflag [#allocation3], 1
    %13 = vsyncpa %s12, 0
    %14 = vsyncpa [#allocation4], 0
    %s15 = scalar_lea.sflag [#allocation4], 1
    %16 = vsyncpa %s15, 0
    loop: start=0, step=1, limit=4
    $region2: #{tpu_custom_call.1} parent=1 // loop_pre_header
      _
    $region3: #{tpu_custom_call.1} parent=1 // loop_header
      %s18 = sphi 0, %s22
      %p19 = scmp.ge.s32.totalorder %s18, 4
      %s26 = sphi 0, %s26
      %s28 = sphi 0, %s26
      %s29 = sphi 0, %s28
      %s43 = sphi 0, %s29
      %s49 = sphi 0, %s51
      %s52 = sphi 0, %s49
      %s53 = sphi 0, %s52
      %s69 = sphi 0, %s53
      %s73 = sphi 0, %s73
      %s75 = sphi 0, %s73
      %s76 = sphi 0, %s75
      %s90 = sphi 0, %s76
      %s94 = sphi 0, %s94
      %s96 = sphi 0, %s94
      %s97 = sphi 0, %s96
      %s111 = sphi 0, %s97
      %s115 = sphi 0, %s115
      %s117 = sphi 0, %s115
      %s118 = sphi 0, %s117
      %s132 = sphi 0, %s118
      %s138 = sphi 0, %s140
      %s141 = sphi 0, %s138
      %s142 = sphi 0, %s141
      %s158 = sphi 0, %s142
    $region4: #{tpu_custom_call.1} parent=1 // loop_header_branch
      %21 = sbr.rel (%p19) target = $region8
    $region5: #{tpu_custom_call.1} parent=1 // loop_body
      %s23 = ssub.s32 %s18, 1
      %s24 = ssub.s32 %s18, 2
      %s25 = sadd.s32 %s18, 1
      %s27 = sadd.s32 %s26, 1
      %p30 = scmp.eq.s32.totalorder %s18, 1
      %p31 = scmp.ne.s32.totalorder %s26, %s28
      %p32 = scmp.eq.s32.totalorder %s18, 0
      %p33 = por %p31, %p32
      %p34 = scmp.ne.s32.totalorder %s26, %s28
      %p35 = scmp.eq.s32.totalorder %s23, 1
      %p36 = por %p34, %p35
      %p37 = scmp.ne.s32.totalorder %s28, %s29
      %p38 = scmp.eq.s32.totalorder %s23, 0
      %p39 = por %p37, %p38
      %p40 = scmp.ne.s32.totalorder %s28, %s29
      %p41 = scmp.eq.s32.totalorder %s24, 1
      %p42 = por %p40, %p41
      %p44 = scmp.ne.s32.totalorder %s29, %s43
      %p45 = scmp.eq.s32.totalorder %s24, 0
      %p46 = por %p44, %p45
      %s47 = ssub.s32 %s18, %s25
      %p48 = scmp.eq.s32.totalorder %s47, 0
      %s50 = sadd.s32 %s49, 1
      %s51 = scalar_select %p48, %s49, %s50
      %p54 = pneg %p48
      %p55 = scmp.eq.s32.totalorder %s18, 1
      %p56 = por %p54, %p55
      %p57 = scmp.ne.s32.totalorder %s49, %s52
      %p58 = scmp.eq.s32.totalorder %s18, 0
      %p59 = por %p57, %p58
      %p60 = scmp.ne.s32.totalorder %s49, %s52
      %p61 = scmp.eq.s32.totalorder %s23, 1
      %p62 = por %p60, %p61
      %p63 = scmp.ne.s32.totalorder %s52, %s53
      %p64 = scmp.eq.s32.totalorder %s23, 0
      %p65 = por %p63, %p64
      %p66 = scmp.ne.s32.totalorder %s52, %s53
      %p67 = scmp.eq.s32.totalorder %s24, 1
      %p68 = por %p66, %p67
      %p70 = scmp.ne.s32.totalorder %s53, %s69
      %p71 = scmp.eq.s32.totalorder %s24, 0
      %p72 = por %p70, %p71
      %s74 = sadd.s32 %s73, 1
      %p77 = scmp.eq.s32.totalorder %s18, 1
      %p78 = scmp.ne.s32.totalorder %s73, %s75
      %p79 = scmp.eq.s32.totalorder %s18, 0
      %p80 = por %p78, %p79
      %p81 = scmp.ne.s32.totalorder %s73, %s75
      %p82 = scmp.eq.s32.totalorder %s23, 1
      %p83 = por %p81, %p82
      %p84 = scmp.ne.s32.totalorder %s75, %s76
      %p85 = scmp.eq.s32.totalorder %s23, 0
      %p86 = por %p84, %p85
      %p87 = scmp.ne.s32.totalorder %s75, %s76
      %p88 = scmp.eq.s32.totalorder %s24, 1
      %p89 = por %p87, %p88
      %p91 = scmp.ne.s32.totalorder %s76, %s90
      %p92 = scmp.eq.s32.totalorder %s24, 0
      %p93 = por %p91, %p92
      %s95 = sadd.s32 %s94, 1
      %p98 = scmp.eq.s32.totalorder %s18, 1
      %p99 = scmp.ne.s32.totalorder %s94, %s96
      %p100 = scmp.eq.s32.totalorder %s18, 0
      %p101 = por %p99, %p100
      %p102 = scmp.ne.s32.totalorder %s94, %s96
      %p103 = scmp.eq.s32.totalorder %s23, 1
      %p104 = por %p102, %p103
      %p105 = scmp.ne.s32.totalorder %s96, %s97
      %p106 = scmp.eq.s32.totalorder %s23, 0
      %p107 = por %p105, %p106
      %p108 = scmp.ne.s32.totalorder %s96, %s97
      %p109 = scmp.eq.s32.totalorder %s24, 1
      %p110 = por %p108, %p109
      %p112 = scmp.ne.s32.totalorder %s97, %s111
      %p113 = scmp.eq.s32.totalorder %s24, 0
      %p114 = por %p112, %p113
      %s116 = sadd.s32 %s115, 1
      %p119 = scmp.eq.s32.totalorder %s18, 1
      %p120 = scmp.ne.s32.totalorder %s115, %s117
      %p121 = scmp.eq.s32.totalorder %s18, 0
      %p122 = por %p120, %p121
      %p123 = scmp.ne.s32.totalorder %s115, %s117
      %p124 = scmp.eq.s32.totalorder %s23, 1
      %p125 = por %p123, %p124
      %p126 = scmp.ne.s32.totalorder %s117, %s118
      %p127 = scmp.eq.s32.totalorder %s23, 0
      %p128 = por %p126, %p127
      %p129 = scmp.ne.s32.totalorder %s117, %s118
      %p130 = scmp.eq.s32.totalorder %s24, 1
      %p131 = por %p129, %p130
      %p133 = scmp.ne.s32.totalorder %s118, %s132
      %p134 = scmp.eq.s32.totalorder %s24, 0
      %p135 = por %p133, %p134
      %s136 = ssub.s32 %s18, %s25
      %p137 = scmp.eq.s32.totalorder %s136, 0
      %s139 = sadd.s32 %s138, 1
      %s140 = scalar_select %p137, %s138, %s139
      %p143 = pneg %p137
      %p144 = scmp.eq.s32.totalorder %s18, 1
      %p145 = por %p143, %p144
      %p146 = scmp.ne.s32.totalorder %s138, %s141
      %p147 = scmp.eq.s32.totalorder %s18, 0
      %p148 = por %p146, %p147
      %p149 = scmp.ne.s32.totalorder %s138, %s141
      %p150 = scmp.eq.s32.totalorder %s23, 1
      %p151 = por %p149, %p150
      %p152 = scmp.ne.s32.totalorder %s141, %s142
      %p153 = scmp.eq.s32.totalorder %s23, 0
      %p154 = por %p152, %p153
      %p155 = scmp.ne.s32.totalorder %s141, %s142
      %p156 = scmp.eq.s32.totalorder %s24, 1
      %p157 = por %p155, %p156
      %p159 = scmp.ne.s32.totalorder %s142, %s158
      %p160 = scmp.eq.s32.totalorder %s24, 0
      %p161 = por %p159, %p160
      %p162 = scmp.le.s32.totalorder 1, %s18
      %p163 = scmp.lt.s32.totalorder %s18, 3
      %p164 = pnand %p162, %p163
      %p165 = pneg %p164
      // Predicated region
      $region9: #{tpu_custom_call.1} parent=5 // pred_check
        _
      $region10: #{tpu_custom_call.1} parent=5 // pred_check_branch
        %167 = sbr.rel (%p164) target = $region12
      $region11: #{tpu_custom_call.1} parent=5 // pred_region
        %s168 = ssub.s32 %s18, 1
        // Predicated region
        $region13: #{tpu_custom_call.1} parent=11 // pred_check
          %p169 = pneg %p39
        $region14: #{tpu_custom_call.1} parent=11 // pred_check_branch
          %171 = sbr.rel (%p169) target = $region16
        $region15: #{tpu_custom_call.1} parent=11 // pred_region
          %s173 = ssub.s32 16, 16
          %174 = vsyncadd [#allocation5], %s173
          %s176 = sshll.u32 %s0, 4
          %s177 = int_to_ptr.vmem [resolvable:$true] %s176
          %179 = dma.vmem_to_smem %s177, 16, [#allocation2], [#allocation5]
        $region16: #{tpu_custom_call.1} parent=11 // pred_fallthru
          _
        // Predicated region
        $region17: #{tpu_custom_call.1} parent=11 // pred_check
          %p180 = pneg %p86
        $region18: #{tpu_custom_call.1} parent=11 // pred_check_branch
          %182 = sbr.rel (%p180) target = $region20
        $region19: #{tpu_custom_call.1} parent=11 // pred_region
          _
        $region20: #{tpu_custom_call.1} parent=11 // pred_fallthru
          _
        // Predicated region
        $region21: #{tpu_custom_call.1} parent=11 // pred_check
          %p183 = pneg %p107
        $region22: #{tpu_custom_call.1} parent=11 // pred_check_branch
          %185 = sbr.rel (%p183) target = $region24
        $region23: #{tpu_custom_call.1} parent=11 // pred_region
          _
        $region24: #{tpu_custom_call.1} parent=11 // pred_fallthru
          _
        // Predicated region
        $region25: #{tpu_custom_call.1} parent=11 // pred_check
          %p186 = pneg %p128
        $region26: #{tpu_custom_call.1} parent=11 // pred_check_branch
          %188 = sbr.rel (%p186) target = $region28
        $region27: #{tpu_custom_call.1} parent=11 // pred_region
          _
        $region28: #{tpu_custom_call.1} parent=11 // pred_fallthru
          _
      $region12: #{tpu_custom_call.1} parent=5 // pred_fallthru
        _
      %p189 = scmp.lt.s32.totalorder %s18, 2
      // Predicated region
      $region29: #{tpu_custom_call.1} parent=5 // pred_check
        %p190 = pneg %p189
      $region30: #{tpu_custom_call.1} parent=5 // pred_check_branch
        %192 = sbr.rel (%p190) target = $region32
      $region31: #{tpu_custom_call.1} parent=5 // pred_region
        // Predicated region
        $region33: #{tpu_custom_call.1} parent=31 // pred_check
          %p193 = pneg %p59
        $region34: #{tpu_custom_call.1} parent=31 // pred_check_branch
          %195 = sbr.rel (%p193) target = $region36
        $region35: #{tpu_custom_call.1} parent=31 // pred_region
          %s196 = sand.u32 %s49, 1
          %s197 = scalar_lea.sflag [#allocation3], %s196
          %s198 = sand.u32 %s49, 1
          %s199 = smul.addr %s198, 32
          %s200 = scalar_lea.vmem [#allocation6], %s199
          %s201 = smul.u32 4, %s18
          %s203 = ssub.s32 512, 512
          %204 = vsyncadd %s197, %s203
          %s205 = smul.addr %s201, 128
          %s206 = scalar_lea.hbm %s1, %s205
          %s208 = sshll.u32 %s200, 4
          %s209 = int_to_ptr.vmem [resolvable:$true] %s208
          %211 = dma.hbm_to_vmem [thread:$0]  %s206, 512, %s209, %s197
        $region36: #{tpu_custom_call.1} parent=31 // pred_fallthru
          _
      $region32: #{tpu_custom_call.1} parent=5 // pred_fallthru
        _
      %p212 = scmp.le.s32.totalorder 1, %s18
      %p213 = scmp.lt.s32.totalorder %s18, 3
      %p214 = pnand %p212, %p213
      %p215 = pneg %p214
      // Predicated region
      $region37: #{tpu_custom_call.1} parent=5 // pred_check
        _
      $region38: #{tpu_custom_call.1} parent=5 // pred_check_branch
        %217 = sbr.rel (%p214) target = $region40
      $region39: #{tpu_custom_call.1} parent=5 // pred_region
        %s218 = ssub.s32 %s18, 1
        // Predicated region
        $region41: #{tpu_custom_call.1} parent=39 // pred_check
          %p219 = pneg %p39
        $region42: #{tpu_custom_call.1} parent=39 // pred_check_branch
          %221 = sbr.rel (%p219) target = $region44
        $region43: #{tpu_custom_call.1} parent=39 // pred_region
          %222 = dma.done [#allocation5], 16
        $region44: #{tpu_custom_call.1} parent=39 // pred_fallthru
          _
        %s223 = sand.u32 %s52, 1
        %s224 = scalar_lea.sflag [#allocation3], %s223
        %s225 = sand.u32 %s52, 1
        %s226 = smul.addr %s225, 32
        %s227 = scalar_lea.vmem [#allocation6], %s226
        // Predicated region
        $region45: #{tpu_custom_call.1} parent=39 // pred_check
          %p228 = pneg %p65
        $region46: #{tpu_custom_call.1} parent=39 // pred_check_branch
          %230 = sbr.rel (%p228) target = $region48
        $region47: #{tpu_custom_call.1} parent=39 // pred_region
          %231 = dma.done %s224, 512
        $region48: #{tpu_custom_call.1} parent=39 // pred_fallthru
          _
        %232 = sfence
        %p233 = pneg %p39
        %p234 = pneg %p36
        %s235 = sand.u32 %s52, 1
        %s236 = scalar_lea.sflag [#allocation3], %s235
        %s237 = sand.u32 %s52, 1
        %s238 = smul.addr %s237, 32
        %s239 = scalar_lea.vmem [#allocation6], %s238
        %p240 = pneg %p65
        %p241 = pneg %p62
        %p242 = pneg %p86
        %p243 = pneg %p83
        %p244 = pneg %p107
        %p245 = pneg %p104
        %p246 = pneg %p128
        %p247 = pneg %p125
        %p248 = pneg %p154
        %p249 = pneg %p151
        %s250 = sand.u32 %s141, 1
        %s251 = scalar_lea.sflag [#allocation4], %s250
        %s252 = sand.u32 %s141, 1
        %s253 = smul.addr %s252, 64
        %s254 = scalar_lea.vmem [#allocation7], %s253
        %s255 = smul.u32 4, %s23
        %s256 = smul.u32 4, %s23
        %s257 = sld [smem:[#allocation2]]
        %s258 = sld [smem:[#allocation2 + $0x1]]
        %s259 = sld [smem:[#allocation2 + $0x2]]
        %s260 = sld [smem:[#allocation2 + $0x3]]
        %s261 = sld [smem:[#allocation2 + $0x4]]
        %s262 = sld [smem:[#allocation2 + $0x5]]
        %v263 = vld [vmem:[%s227] ss:$8 sm:$0xf]
        %s264 = scalar_lea.vmem %s227, 1 [#allocation6]
        %v265 = vld [vmem:[%s264] ss:$8 sm:$0xf]
        %s266 = scalar_lea.vmem %s227, 2 [#allocation6]
        %v267 = vld [vmem:[%s266] ss:$8 sm:$0xf]
        %v268 = vstv %s257
        %v269 = vmul.f32 %v268, %v263
        %v270 = vstv %s258
        %v271 = vadd.f32 %v269, %v270
        %v272 = vmax.f32 %v271, 0.0
        %v273 = vmin.f32 %v272, 15.0
        %v274 = vstv %s259
        %v275 = vmul.f32 %v274, %v265
        %v276 = vstv %s260
        %v277 = vadd.f32 %v275, %v276
        %v278 = vmax.f32 %v277, 0.0
        %v279 = vmin.f32 %v278, 15.0
        %v280 = vstv %s261
        %v281 = vmul.f32 %v280, %v267
        %v282 = vstv %s262
        %v283 = vadd.f32 %v281, %v282
        %v284 = vmax.f32 %v283, 0.0
        %v285 = vmin.f32 %v284, 7.0
        %v286 = vfloor.f32 %v273
        %v287 = vsub.f32 %v273, %v286
        %v288 = vfloor.f32 %v279
        %v289 = vsub.f32 %v279, %v288
        %v290 = vfloor.f32 %v285
        %v291 = vsub.f32 %v285, %v290
        %v292 = vcvt.f32.s32.to.zero.pseudo %v286
        %v293 = vadd.s32 %v292, 1
        %vm294 = vcmp.lt.s32.totalorder %v293, 15
        %v295 = vsel %vm294, %v293, 15
        %v296 = vcvt.f32.s32.to.zero.pseudo %v288
        %v297 = vadd.s32 %v296, 1
        %vm298 = vcmp.lt.s32.totalorder %v297, 15
        %v299 = vsel %vm298, %v297, 15
        %v300 = vcvt.f32.s32.to.zero.pseudo %v290
        %v301 = vadd.s32 %v300, 1
        %vm302 = vcmp.lt.s32.totalorder %v301, 7
        %v303 = vsel %vm302, %v301, 7
        %v304 = vlaneseq
        %v305 = vshrl.u32 %v304, 7
        %v306 = vlaneseq
        %v307 = vshrl.u32 %v306, 7
        %v308 = vsub.s32 0, %v307
        %v309 = vrot.slane %v300, %v308
        %v310 = vlaneseq
        %v311 = vshrl.u32 %v310, 7
        %v312 = vsub.s32 1, %v311
        %v313 = vrot.slane %v300, %v312
        %v314 = vlaneseq
        %v315 = vshrl.u32 %v314, 7
        %v316 = vsub.s32 2, %v315
        %v317 = vrot.slane %v300, %v316
        %v318 = vlaneseq
        %v319 = vshrl.u32 %v318, 7
        %v320 = vsub.s32 3, %v319
        %v321 = vrot.slane %v300, %v320
        %vm322 = vcmp.eq.s32.totalorder %v305, %v309
        %vm323 = vcmp.eq.s32.totalorder %v305, %v313
        %vm324 = vcmp.eq.s32.totalorder %v305, %v317
        %vm325 = vcmp.eq.s32.totalorder %v305, %v321
        %v326 = vsub.f32 1.0, %v291
        %v328 = vlaneseq
        %v329 = vshrl.u32 %v328, 7
        %v330 = vsub.s32 0, %v329
        %v331 = vrot.slane %v326, %v330
        %v332 = vlaneseq
        %v333 = vshrl.u32 %v332, 7
        %v334 = vsub.s32 1, %v333
        %v335 = vrot.slane %v326, %v334
        %v336 = vlaneseq
        %v337 = vshrl.u32 %v336, 7
        %v338 = vsub.s32 2, %v337
        %v339 = vrot.slane %v326, %v338
        %v340 = vlaneseq
        %v341 = vshrl.u32 %v340, 7
        %v342 = vsub.s32 3, %v341
        %v343 = vrot.slane %v326, %v342
        %v348 = vsel %vm322, %v331, 0.0
        %v349 = vsel %vm323, %v335, 0.0
        %v350 = vsel %vm324, %v339, 0.0
        %v351 = vsel %vm325, %v343, 0.0
        %v352 = vlaneseq
        %v353 = vshrl.u32 %v352, 7
        %v354 = vsub.s32 0, %v353
        %v355 = vrot.slane %v303, %v354
        %v356 = vlaneseq
        %v357 = vshrl.u32 %v356, 7
        %v358 = vsub.s32 1, %v357
        %v359 = vrot.slane %v303, %v358
        %v360 = vlaneseq
        %v361 = vshrl.u32 %v360, 7
        %v362 = vsub.s32 2, %v361
        %v363 = vrot.slane %v303, %v362
        %v364 = vlaneseq
        %v365 = vshrl.u32 %v364, 7
        %v366 = vsub.s32 3, %v365
        %v367 = vrot.slane %v303, %v366
        %vm368 = vcmp.eq.s32.totalorder %v305, %v355
        %vm369 = vcmp.eq.s32.totalorder %v305, %v359
        %vm370 = vcmp.eq.s32.totalorder %v305, %v363
        %vm371 = vcmp.eq.s32.totalorder %v305, %v367
        %v373 = vlaneseq
        %v374 = vshrl.u32 %v373, 7
        %v375 = vsub.s32 0, %v374
        %v376 = vrot.slane %v291, %v375
        %v377 = vlaneseq
        %v378 = vshrl.u32 %v377, 7
        %v379 = vsub.s32 1, %v378
        %v380 = vrot.slane %v291, %v379
        %v381 = vlaneseq
        %v382 = vshrl.u32 %v381, 7
        %v383 = vsub.s32 2, %v382
        %v384 = vrot.slane %v291, %v383
        %v385 = vlaneseq
        %v386 = vshrl.u32 %v385, 7
        %v387 = vsub.s32 3, %v386
        %v388 = vrot.slane %v291, %v387
        %v393 = vsel %vm368, %v376, 0.0
        %v394 = vsel %vm369, %v380, 0.0
        %v395 = vsel %vm370, %v384, 0.0
        %v396 = vsel %vm371, %v388, 0.0
        %v397 = vadd.f32 %v348, %v393
        %v398 = vadd.f32 %v349, %v394
        %v399 = vadd.f32 %v350, %v395
        %v400 = vadd.f32 %v351, %v396
        %v401 = vadd.s32 %v305, 8
        %v402 = vlaneseq
        %v403 = vshrl.u32 %v402, 7
        %v404 = vsub.s32 0, %v403
        %v405 = vrot.slane %v296, %v404
        %v406 = vlaneseq
        %v407 = vshrl.u32 %v406, 7
        %v408 = vsub.s32 1, %v407
        %v409 = vrot.slane %v296, %v408
        %v410 = vlaneseq
        %v411 = vshrl.u32 %v410, 7
        %v412 = vsub.s32 2, %v411
        %v413 = vrot.slane %v296, %v412
        %v414 = vlaneseq
        %v415 = vshrl.u32 %v414, 7
        %v416 = vsub.s32 3, %v415
        %v417 = vrot.slane %v296, %v416
        %vm418 = vcmp.eq.s32.totalorder %v305, %v405
        %vm419 = vcmp.eq.s32.totalorder %v305, %v409
        %vm420 = vcmp.eq.s32.totalorder %v305, %v413
        %vm421 = vcmp.eq.s32.totalorder %v305, %v417
        %vm422 = vcmp.eq.s32.totalorder %v401, %v405
        %vm423 = vcmp.eq.s32.totalorder %v401, %v409
        %vm424 = vcmp.eq.s32.totalorder %v401, %v413
        %vm425 = vcmp.eq.s32.totalorder %v401, %v417
        %v426 = vsub.f32 1.0, %v289
        %v428 = vlaneseq
        %v429 = vshrl.u32 %v428, 7
        %v430 = vsub.s32 0, %v429
        %v431 = vrot.slane %v426, %v430
        %v432 = vlaneseq
        %v433 = vshrl.u32 %v432, 7
        %v434 = vsub.s32 1, %v433
        %v435 = vrot.slane %v426, %v434
        %v436 = vlaneseq
        %v437 = vshrl.u32 %v436, 7
        %v438 = vsub.s32 2, %v437
        %v439 = vrot.slane %v426, %v438
        %v440 = vlaneseq
        %v441 = vshrl.u32 %v440, 7
        %v442 = vsub.s32 3, %v441
        %v443 = vrot.slane %v426, %v442
        %v448 = vsel %vm418, %v431, 0.0
        %v449 = vsel %vm419, %v435, 0.0
        %v450 = vsel %vm420, %v439, 0.0
        %v451 = vsel %vm421, %v443, 0.0
        %v452 = vsel %vm422, %v431, 0.0
        %v453 = vsel %vm423, %v435, 0.0
        %v454 = vsel %vm424, %v439, 0.0
        %v455 = vsel %vm425, %v443, 0.0
        %v456 = vlaneseq
        %v457 = vshrl.u32 %v456, 7
        %v458 = vsub.s32 0, %v457
        %v459 = vrot.slane %v299, %v458
        %v460 = vlaneseq
        %v461 = vshrl.u32 %v460, 7
        %v462 = vsub.s32 1, %v461
        %v463 = vrot.slane %v299, %v462
        %v464 = vlaneseq
        %v465 = vshrl.u32 %v464, 7
        %v466 = vsub.s32 2, %v465
        %v467 = vrot.slane %v299, %v466
        %v468 = vlaneseq
        %v469 = vshrl.u32 %v468, 7
        %v470 = vsub.s32 3, %v469
        %v471 = vrot.slane %v299, %v470
        %vm472 = vcmp.eq.s32.totalorder %v305, %v459
        %vm473 = vcmp.eq.s32.totalorder %v305, %v463
        %vm474 = vcmp.eq.s32.totalorder %v305, %v467
        %vm475 = vcmp.eq.s32.totalorder %v305, %v471
        %vm476 = vcmp.eq.s32.totalorder %v401, %v459
        %vm477 = vcmp.eq.s32.totalorder %v401, %v463
        %vm478 = vcmp.eq.s32.totalorder %v401, %v467
        %vm479 = vcmp.eq.s32.totalorder %v401, %v471
        %v481 = vlaneseq
        %v482 = vshrl.u32 %v481, 7
        %v483 = vsub.s32 0, %v482
        %v484 = vrot.slane %v289, %v483
        %v485 = vlaneseq
        %v486 = vshrl.u32 %v485, 7
        %v487 = vsub.s32 1, %v486
        %v488 = vrot.slane %v289, %v487
        %v489 = vlaneseq
        %v490 = vshrl.u32 %v489, 7
        %v491 = vsub.s32 2, %v490
        %v492 = vrot.slane %v289, %v491
        %v493 = vlaneseq
        %v494 = vshrl.u32 %v493, 7
        %v495 = vsub.s32 3, %v494
        %v496 = vrot.slane %v289, %v495
        %v501 = vsel %vm472, %v484, 0.0
        %v502 = vsel %vm473, %v488, 0.0
        %v503 = vsel %vm474, %v492, 0.0
        %v504 = vsel %vm475, %v496, 0.0
        %v505 = vsel %vm476, %v484, 0.0
        %v506 = vsel %vm477, %v488, 0.0
        %v507 = vsel %vm478, %v492, 0.0
        %v508 = vsel %vm479, %v496, 0.0
        %v509 = vadd.f32 %v448, %v501
        %v510 = vadd.f32 %v449, %v502
        %v511 = vadd.f32 %v450, %v503
        %v512 = vadd.f32 %v451, %v504
        %v513 = vadd.f32 %v452, %v505
        %v514 = vadd.f32 %v453, %v506
        %v515 = vadd.f32 %v454, %v507
        %v516 = vadd.f32 %v455, %v508
        %v517 = vlaneseq
        %v518 = vshrl.u32 %v517, 7
        %v519 = vsub.s32 0, %v518
        %v520 = vrot.slane %v292, %v519
        %v521 = vlaneseq
        %v522 = vshrl.u32 %v521, 7
        %v523 = vsub.s32 1, %v522
        %v524 = vrot.slane %v292, %v523
        %v525 = vlaneseq
        %v526 = vshrl.u32 %v525, 7
        %v527 = vsub.s32 2, %v526
        %v528 = vrot.slane %v292, %v527
        %v529 = vlaneseq
        %v530 = vshrl.u32 %v529, 7
        %v531 = vsub.s32 3, %v530
        %v532 = vrot.slane %v292, %v531
        %vm533 = vcmp.eq.s32.totalorder %v305, %v520
        %vm534 = vcmp.eq.s32.totalorder %v305, %v524
        %vm535 = vcmp.eq.s32.totalorder %v305, %v528
        %vm536 = vcmp.eq.s32.totalorder %v305, %v532
        %vm537 = vcmp.eq.s32.totalorder %v401, %v520
        %vm538 = vcmp.eq.s32.totalorder %v401, %v524
        %vm539 = vcmp.eq.s32.totalorder %v401, %v528
        %vm540 = vcmp.eq.s32.totalorder %v401, %v532
        %v541 = vsub.f32 1.0, %v287
        %v543 = vlaneseq
        %v544 = vshrl.u32 %v543, 7
        %v545 = vsub.s32 0, %v544
        %v546 = vrot.slane %v541, %v545
        %v547 = vlaneseq
        %v548 = vshrl.u32 %v547, 7
        %v549 = vsub.s32 1, %v548
        %v550 = vrot.slane %v541, %v549
        %v551 = vlaneseq
        %v552 = vshrl.u32 %v551, 7
        %v553 = vsub.s32 2, %v552
        %v554 = vrot.slane %v541, %v553
        %v555 = vlaneseq
        %v556 = vshrl.u32 %v555, 7
        %v557 = vsub.s32 3, %v556
        %v558 = vrot.slane %v541, %v557
        %v563 = vsel %vm533, %v546, 0.0
        %v564 = vsel %vm534, %v550, 0.0
        %v565 = vsel %vm535, %v554, 0.0
        %v566 = vsel %vm536, %v558, 0.0
        %v567 = vsel %vm537, %v546, 0.0
        %v568 = vsel %vm538, %v550, 0.0
        %v569 = vsel %vm539, %v554, 0.0
        %v570 = vsel %vm540, %v558, 0.0
        %v571 = vlaneseq
        %v572 = vshrl.u32 %v571, 7
        %v573 = vsub.s32 0, %v572
        %v574 = vrot.slane %v295, %v573
        %v575 = vlaneseq
        %v576 = vshrl.u32 %v575, 7
        %v577 = vsub.s32 1, %v576
        %v578 = vrot.slane %v295, %v577
        %v579 = vlaneseq
        %v580 = vshrl.u32 %v579, 7
        %v581 = vsub.s32 2, %v580
        %v582 = vrot.slane %v295, %v581
        %v583 = vlaneseq
        %v584 = vshrl.u32 %v583, 7
        %v585 = vsub.s32 3, %v584
        %v586 = vrot.slane %v295, %v585
        %vm587 = vcmp.eq.s32.totalorder %v305, %v574
        %vm588 = vcmp.eq.s32.totalorder %v305, %v578
        %vm589 = vcmp.eq.s32.totalorder %v305, %v582
        %vm590 = vcmp.eq.s32.totalorder %v305, %v586
        %vm591 = vcmp.eq.s32.totalorder %v401, %v574
        %vm592 = vcmp.eq.s32.totalorder %v401, %v578
        %vm593 = vcmp.eq.s32.totalorder %v401, %v582
        %vm594 = vcmp.eq.s32.totalorder %v401, %v586
        %v596 = vlaneseq
        %v597 = vshrl.u32 %v596, 7
        %v598 = vsub.s32 0, %v597
        %v599 = vrot.slane %v287, %v598
        %v600 = vlaneseq
        %v601 = vshrl.u32 %v600, 7
        %v602 = vsub.s32 1, %v601
        %v603 = vrot.slane %v287, %v602
        %v604 = vlaneseq
        %v605 = vshrl.u32 %v604, 7
        %v606 = vsub.s32 2, %v605
        %v607 = vrot.slane %v287, %v606
        %v608 = vlaneseq
        %v609 = vshrl.u32 %v608, 7
        %v610 = vsub.s32 3, %v609
        %v611 = vrot.slane %v287, %v610
        %v616 = vsel %vm587, %v599, 0.0
        %v617 = vsel %vm588, %v603, 0.0
        %v618 = vsel %vm589, %v607, 0.0
        %v619 = vsel %vm590, %v611, 0.0
        %v620 = vsel %vm591, %v599, 0.0
        %v621 = vsel %vm592, %v603, 0.0
        %v622 = vsel %vm593, %v607, 0.0
        %v623 = vsel %vm594, %v611, 0.0
        %v624 = vadd.f32 %v563, %v616
        %v625 = vadd.f32 %v564, %v617
        %v626 = vadd.f32 %v565, %v618
        %v627 = vadd.f32 %v566, %v619
        %v628 = vadd.f32 %v567, %v620
        %v629 = vadd.f32 %v568, %v621
        %v630 = vadd.f32 %v569, %v622
        %v631 = vadd.f32 %v570, %v623
        %v632 = vld [vmem:[%s2] sm:$0xff]
        %v633 = vld [vmem:[%s2 + $0x8] sm:$0xff]
        %v634 = vld [vmem:[%s2 + $0x10] sm:$0xff]
        %v635 = vld [vmem:[%s2 + $0x18] sm:$0xff]
        %v636 = vld [vmem:[%s2 + $0x20] sm:$0xff]
        %v637 = vld [vmem:[%s2 + $0x28] sm:$0xff]
        %v638 = vld [vmem:[%s2 + $0x30] sm:$0xff]
        %v639 = vld [vmem:[%s2 + $0x38] sm:$0xff]
        %v640 = vld [vmem:[%s2 + $0x40] sm:$0xff]
        %v641 = vld [vmem:[%s2 + $0x48] sm:$0xff]
        %v642 = vld [vmem:[%s2 + $0x50] sm:$0xff]
        %v643 = vld [vmem:[%s2 + $0x58] sm:$0xff]
        %v644 = vld [vmem:[%s2 + $0x60] sm:$0xff]
        %v645 = vld [vmem:[%s2 + $0x68] sm:$0xff]
        %v646 = vld [vmem:[%s2 + $0x70] sm:$0xff]
        %v647 = vld [vmem:[%s2 + $0x78] sm:$0xff]
        %vm648 = vcmask 64512
        %v650 = vsel %vm648, %v632, 0
        %v653 = vsel %vm648, %v633, 0
        %v656 = vsel %vm648, %v634, 0
        %v659 = vsel %vm648, %v635, 0
        %v662 = vsel %vm648, %v636, 0
        %v665 = vsel %vm648, %v637, 0
        %v668 = vsel %vm648, %v638, 0
        %v671 = vsel %vm648, %v639, 0
        %v674 = vsel %vm648, %v640, 0
        %v677 = vsel %vm648, %v641, 0
        %v680 = vsel %vm648, %v642, 0
        %v683 = vsel %vm648, %v643, 0
        %v686 = vsel %vm648, %v644, 0
        %v689 = vsel %vm648, %v645, 0
        %v692 = vsel %vm648, %v646, 0
        %v695 = vsel %vm648, %v647, 0
        %697 = vmatprep.subr.mxu0 %v398
        %698 = vmatpush1.msra.mxu0 %v397
        %699 = vmatprep.subr.mxu0 0.0
        %700 = vmatpush1.msra.mxu0 0.0
        %701 = vmatprep.subr.mxu0 0.0
        %702 = vmatpush1.msra.mxu0 0.0
        %703 = vmatprep.subr.mxu0 0.0
        %704 = vmatpush1.msra.mxu0 0.0
        %705 = vmatprep.subr.mxu0 0.0
        %706 = vmatpush1.msra.mxu0 0.0
        %707 = vmatprep.subr.mxu0 0.0
        %708 = vmatpush1.msra.mxu0 0.0
        %709 = vmatprep.subr.mxu0 0.0
        %710 = vmatpush1.msra.mxu0 0.0
        %711 = vmatprep.subr.mxu0 0.0
        %712 = vmatpush1.msra.mxu0 0.0
        %713 = vmatprep.subr.mxu0 0.0
        %714 = vmatpush1.msra.mxu0 0.0
        %715 = vmatprep.subr.mxu0 0.0
        %716 = vmatpush1.msra.mxu0 0.0
        %717 = vmatprep.subr.mxu0 0.0
        %718 = vmatpush1.msra.mxu0 0.0
        %719 = vmatprep.subr.mxu0 0.0
        %720 = vmatpush1.msra.mxu0 0.0
        %721 = vmatprep.subr.mxu0 0.0
        %722 = vmatpush1.msra.mxu0 0.0
        %723 = vmatprep.subr.mxu0 0.0
        %724 = vmatpush1.msra.mxu0 0.0
        %725 = vmatprep.subr.mxu0 0.0
        %726 = vmatpush1.msra.mxu0 0.0
        %727 = vmatprep.subr.mxu0 0.0
        %728 = vmatpush1.msra.mxu0 0.0
        %729 = vmatprep.subr.mxu0 0.0
        %730 = vmatpush1.msra.mxu0 0.0
        %731 = vmatprep.subr.mxu0 0.0
        %732 = vmatpush1.msra.mxu0 0.0
        %733 = vmatprep.subr.mxu0 0.0
        %734 = vmatpush1.msra.mxu0 0.0
        %735 = vmatprep.subr.mxu0 0.0
        %736 = vmatpush1.msra.mxu0 0.0
        %737 = vmatprep.subr.mxu0 0.0
        %738 = vmatpush1.msra.mxu0 0.0
        %739 = vmatprep.subr.mxu0 0.0
        %740 = vmatpush1.msra.mxu0 0.0
        %741 = vmatprep.subr.mxu0 0.0
        %742 = vmatpush1.msra.mxu0 0.0
        %743 = vmatprep.subr.mxu0 0.0
        %744 = vmatpush1.msra.mxu0 0.0
        %745 = vmatprep.subr.mxu0 0.0
        %746 = vmatpush1.msra.mxu0 0.0
        %747 = vmatprep.subr.mxu0 0.0
        %748 = vmatpush1.msra.mxu0 0.0
        %749 = vmatprep.subr.mxu0 0.0
        %750 = vmatpush1.msra.mxu0 0.0
        %751 = vmatprep.subr.mxu0 0.0
        %752 = vmatpush1.msra.mxu0 0.0
        %753 = vmatprep.subr.mxu0 0.0
        %754 = vmatpush1.msra.mxu0 0.0
        %755 = vmatprep.subr.mxu0 0.0
        %756 = vmatpush1.msra.mxu0 0.0
        %757 = vmatprep.subr.mxu0 0.0
        %758 = vmatpush1.msra.mxu0 0.0
        %759 = vmatprep.subr.mxu0 0.0
        %760 = vmatpush1.msra.mxu0 0.0
        %761 = vmatprep.mubr.f32.mxu0 0.0
        %762 = vmatmul.mubr.f32.gmra.mrb[0].mxu0 %v650
        %v763 = vpop.f32.mrb[0].mxu0
        %v764 = vadd.f32 0.0, %v763
        %v765 = vpop.f32.mrb[0].mxu0
        %v766 = vadd.f32 0.0, %v765
        %767 = vmatprep.mubr.f32.mxu0 0.0
        %768 = vmatmul.mubr.f32.gmra.mrb[0].mxu0 %v653
        %v769 = vpop.f32.mrb[0].mxu0
        %v770 = vadd.f32 0.0, %v769
        %v771 = vpop.f32.mrb[0].mxu0
        %v772 = vadd.f32 0.0, %v771
        %773 = vmatprep.mubr.f32.mxu0 0.0
        %774 = vmatmul.mubr.f32.gmra.mrb[0].mxu0 %v656
        %v775 = vpop.f32.mrb[0].mxu0
        %v776 = vadd.f32 0.0, %v775
        %v777 = vpop.f32.mrb[0].mxu0
        %v778 = vadd.f32 0.0, %v777
        %779 = vmatprep.mubr.f32.mxu0 0.0
        %780 = vmatmul.mubr.f32.gmra.mrb[0].mxu0 %v659
        %v781 = vpop.f32.mrb[0].mxu0
        %v782 = vadd.f32 0.0, %v781
        %v783 = vpop.f32.mrb[0].mxu0
        %v784 = vadd.f32 0.0, %v783
        %785 = vmatprep.mubr.f32.mxu0 0.0
        %786 = vmatmul.mubr.f32.gmra.mrb[0].mxu0 %v662
        %v787 = vpop.f32.mrb[0].mxu0
        %v788 = vadd.f32 0.0, %v787
        %v789 = vpop.f32.mrb[0].mxu0
        %v790 = vadd.f32 0.0, %v789
        %791 = vmatprep.mubr.f32.mxu0 0.0
        %792 = vmatmul.mubr.f32.gmra.mrb[0].mxu0 %v665
        %v793 = vpop.f32.mrb[0].mxu0
        %v794 = vadd.f32 0.0, %v793
        %v795 = vpop.f32.mrb[0].mxu0
        %v796 = vadd.f32 0.0, %v795
        %797 = vmatprep.mubr.f32.mxu0 0.0
        %798 = vmatmul.mubr.f32.gmra.mrb[0].mxu0 %v668
        %v799 = vpop.f32.mrb[0].mxu0
        %v800 = vadd.f32 0.0, %v799
        %v801 = vpop.f32.mrb[0].mxu0
        %v802 = vadd.f32 0.0, %v801
        %803 = vmatprep.mubr.f32.mxu0 0.0
        %804 = vmatmul.mubr.f32.gmra.mrb[0].mxu0 %v671
        %v805 = vpop.f32.mrb[0].mxu0
        %v806 = vadd.f32 0.0, %v805
        %v807 = vpop.f32.mrb[0].mxu0
        %v808 = vadd.f32 0.0, %v807
        %809 = vmatprep.mubr.f32.mxu0 0.0
        %810 = vmatmul.mubr.f32.gmra.mrb[0].mxu0 %v674
        %v811 = vpop.f32.mrb[0].mxu0
        %v812 = vadd.f32 0.0, %v811
        %v813 = vpop.f32.mrb[0].mxu0
        %v814 = vadd.f32 0.0, %v813
        %815 = vmatprep.mubr.f32.mxu0 0.0
        %816 = vmatmul.mubr.f32.gmra.mrb[0].mxu0 %v677
        %v817 = vpop.f32.mrb[0].mxu0
        %v818 = vadd.f32 0.0, %v817
        %v819 = vpop.f32.mrb[0].mxu0
        %v820 = vadd.f32 0.0, %v819
        %821 = vmatprep.mubr.f32.mxu0 0.0
        %822 = vmatmul.mubr.f32.gmra.mrb[0].mxu0 %v680
        %v823 = vpop.f32.mrb[0].mxu0
        %v824 = vadd.f32 0.0, %v823
        %v825 = vpop.f32.mrb[0].mxu0
        %v826 = vadd.f32 0.0, %v825
        %827 = vmatprep.mubr.f32.mxu0 0.0
        %828 = vmatmul.mubr.f32.gmra.mrb[0].mxu0 %v683
        %v829 = vpop.f32.mrb[0].mxu0
        %v830 = vadd.f32 0.0, %v829
        %v831 = vpop.f32.mrb[0].mxu0
        %v832 = vadd.f32 0.0, %v831
        %833 = vmatprep.mubr.f32.mxu0 0.0
        %834 = vmatmul.mubr.f32.gmra.mrb[0].mxu0 %v686
        %v835 = vpop.f32.mrb[0].mxu0
        %v836 = vadd.f32 0.0, %v835
        %v837 = vpop.f32.mrb[0].mxu0
        %v838 = vadd.f32 0.0, %v837
        %839 = vmatprep.mubr.f32.mxu0 0.0
        %840 = vmatmul.mubr.f32.gmra.mrb[0].mxu0 %v689
        %v841 = vpop.f32.mrb[0].mxu0
        %v842 = vadd.f32 0.0, %v841
        %v843 = vpop.f32.mrb[0].mxu0
        %v844 = vadd.f32 0.0, %v843
        %845 = vmatprep.mubr.f32.mxu0 0.0
        %846 = vmatmul.mubr.f32.gmra.mrb[0].mxu0 %v692
        %v847 = vpop.f32.mrb[0].mxu0
        %v848 = vadd.f32 0.0, %v847
        %v849 = vpop.f32.mrb[0].mxu0
        %v850 = vadd.f32 0.0, %v849
        %851 = vmatprep.mubr.f32.mxu0 0.0
        %852 = vmatmul.mubr.f32.gmra.mrb[0].mxu0 %v695
        %v853 = vpop.f32.mrb[0].mxu0
        %v854 = vadd.f32 0.0, %v853
        %v855 = vpop.f32.mrb[0].mxu0
        %v856 = vadd.f32 0.0, %v855
        %857 = vdwg.mxu0
        %858 = vmatprep.subr.mxu0 %v400
        %859 = vmatpush1.msra.mxu0 %v399
        %860 = vmatprep.subr.mxu0 0.0
        %861 = vmatpush1.msra.mxu0 0.0
        %862 = vmatprep.subr.mxu0 0.0
        %863 = vmatpush1.msra.mxu0 0.0
        %864 = vmatprep.subr.mxu0 0.0
        %865 = vmatpush1.msra.mxu0 0.0
        %866 = vmatprep.subr.mxu0 0.0
        %867 = vmatpush1.msra.mxu0 0.0
        %868 = vmatprep.subr.mxu0 0.0
        %869 = vmatpush1.msra.mxu0 0.0
        %870 = vmatprep.subr.mxu0 0.0
        %871 = vmatpush1.msra.mxu0 0.0
        %872 = vmatprep.subr.mxu0 0.0
        %873 = vmatpush1.msra.mxu0 0.0
        %874 = vmatprep.subr.mxu0 0.0
        %875 = vmatpush1.msra.mxu0 0.0
        %876 = vmatprep.subr.mxu0 0.0
        %877 = vmatpush1.msra.mxu0 0.0
        %878 = vmatprep.subr.mxu0 0.0
        %879 = vmatpush1.msra.mxu0 0.0
        %880 = vmatprep.subr.mxu0 0.0
        %881 = vmatpush1.msra.mxu0 0.0
        %882 = vmatprep.subr.mxu0 0.0
        %883 = vmatpush1.msra.mxu0 0.0
        %884 = vmatprep.subr.mxu0 0.0
        %885 = vmatpush1.msra.mxu0 0.0
        %886 = vmatprep.subr.mxu0 0.0
        %887 = vmatpush1.msra.mxu0 0.0
        %888 = vmatprep.subr.mxu0 0.0
        %889 = vmatpush1.msra.mxu0 0.0
        %890 = vmatprep.subr.mxu0 0.0
        %891 = vmatpush1.msra.mxu0 0.0
        %892 = vmatprep.subr.mxu0 0.0
        %893 = vmatpush1.msra.mxu0 0.0
        %894 = vmatprep.subr.mxu0 0.0
        %895 = vmatpush1.msra.mxu0 0.0
        %896 = vmatprep.subr.mxu0 0.0
        %897 = vmatpush1.msra.mxu0 0.0
        %898 = vmatprep.subr.mxu0 0.0
        %899 = vmatpush1.msra.mxu0 0.0
        %900 = vmatprep.subr.mxu0 0.0
        %901 = vmatpush1.msra.mxu0 0.0
        %902 = vmatprep.subr.mxu0 0.0
        %903 = vmatpush1.msra.mxu0 0.0
        %904 = vmatprep.subr.mxu0 0.0
        %905 = vmatpush1.msra.mxu0 0.0
        %906 = vmatprep.subr.mxu0 0.0
        %907 = vmatpush1.msra.mxu0 0.0
        %908 = vmatprep.subr.mxu0 0.0
        %909 = vmatpush1.msra.mxu0 0.0
        %910 = vmatprep.subr.mxu0 0.0
        %911 = vmatpush1.msra.mxu0 0.0
        %912 = vmatprep.subr.mxu0 0.0
        %913 = vmatpush1.msra.mxu0 0.0
        %914 = vmatprep.subr.mxu0 0.0
        %915 = vmatpush1.msra.mxu0 0.0
        %916 = vmatprep.subr.mxu0 0.0
        %917 = vmatpush1.msra.mxu0 0.0
        %918 = vmatprep.subr.mxu0 0.0
        %919 = vmatpush1.msra.mxu0 0.0
        %920 = vmatprep.subr.mxu0 0.0
        %921 = vmatpush1.msra.mxu0 0.0
        %922 = vmatprep.mubr.f32.mxu0 0.0
        %923 = vmatmul.mubr.f32.gmra.mrb[0].mxu0 %v650
        %v924 = vpop.f32.mrb[0].mxu0
        %v925 = vadd.f32 0.0, %v924
        %v926 = vpop.f32.mrb[0].mxu0
        %v927 = vadd.f32 0.0, %v926
        %928 = vmatprep.mubr.f32.mxu0 0.0
        %929 = vmatmul.mubr.f32.gmra.mrb[0].mxu0 %v653
        %v930 = vpop.f32.mrb[0].mxu0
        %v931 = vadd.f32 0.0, %v930
        %v932 = vpop.f32.mrb[0].mxu0
        %v933 = vadd.f32 0.0, %v932
        %934 = vmatprep.mubr.f32.mxu0 0.0
        %935 = vmatmul.mubr.f32.gmra.mrb[0].mxu0 %v656
        %v936 = vpop.f32.mrb[0].mxu0
        %v937 = vadd.f32 0.0, %v936
        %v938 = vpop.f32.mrb[0].mxu0
        %v939 = vadd.f32 0.0, %v938
        %940 = vmatprep.mubr.f32.mxu0 0.0
        %941 = vmatmul.mubr.f32.gmra.mrb[0].mxu0 %v659
        %v942 = vpop.f32.mrb[0].mxu0
        %v943 = vadd.f32 0.0, %v942
        %v944 = vpop.f32.mrb[0].mxu0
        %v945 = vadd.f32 0.0, %v944
        %946 = vmatprep.mubr.f32.mxu0 0.0
        %947 = vmatmul.mubr.f32.gmra.mrb[0].mxu0 %v662
        %v948 = vpop.f32.mrb[0].mxu0
        %v949 = vadd.f32 0.0, %v948
        %v950 = vpop.f32.mrb[0].mxu0
        %v951 = vadd.f32 0.0, %v950
        %952 = vmatprep.mubr.f32.mxu0 0.0
        %953 = vmatmul.mubr.f32.gmra.mrb[0].mxu0 %v665
        %v954 = vpop.f32.mrb[0].mxu0
        %v955 = vadd.f32 0.0, %v954
        %v956 = vpop.f32.mrb[0].mxu0
        %v957 = vadd.f32 0.0, %v956
        %958 = vmatprep.mubr.f32.mxu0 0.0
        %959 = vmatmul.mubr.f32.gmra.mrb[0].mxu0 %v668
        %v960 = vpop.f32.mrb[0].mxu0
        %v961 = vadd.f32 0.0, %v960
        %v962 = vpop.f32.mrb[0].mxu0
        %v963 = vadd.f32 0.0, %v962
        %964 = vmatprep.mubr.f32.mxu0 0.0
        %965 = vmatmul.mubr.f32.gmra.mrb[0].mxu0 %v671
        %v966 = vpop.f32.mrb[0].mxu0
        %v967 = vadd.f32 0.0, %v966
        %v968 = vpop.f32.mrb[0].mxu0
        %v969 = vadd.f32 0.0, %v968
        %970 = vmatprep.mubr.f32.mxu0 0.0
        %971 = vmatmul.mubr.f32.gmra.mrb[0].mxu0 %v674
        %v972 = vpop.f32.mrb[0].mxu0
        %v973 = vadd.f32 0.0, %v972
        %v974 = vpop.f32.mrb[0].mxu0
        %v975 = vadd.f32 0.0, %v974
        %976 = vmatprep.mubr.f32.mxu0 0.0
        %977 = vmatmul.mubr.f32.gmra.mrb[0].mxu0 %v677
        %v978 = vpop.f32.mrb[0].mxu0
        %v979 = vadd.f32 0.0, %v978
        %v980 = vpop.f32.mrb[0].mxu0
        %v981 = vadd.f32 0.0, %v980
        %982 = vmatprep.mubr.f32.mxu0 0.0
        %983 = vmatmul.mubr.f32.gmra.mrb[0].mxu0 %v680
        %v984 = vpop.f32.mrb[0].mxu0
        %v985 = vadd.f32 0.0, %v984
        %v986 = vpop.f32.mrb[0].mxu0
        %v987 = vadd.f32 0.0, %v986
        %988 = vmatprep.mubr.f32.mxu0 0.0
        %989 = vmatmul.mubr.f32.gmra.mrb[0].mxu0 %v683
        %v990 = vpop.f32.mrb[0].mxu0
        %v991 = vadd.f32 0.0, %v990
        %v992 = vpop.f32.mrb[0].mxu0
        %v993 = vadd.f32 0.0, %v992
        %994 = vmatprep.mubr.f32.mxu0 0.0
        %995 = vmatmul.mubr.f32.gmra.mrb[0].mxu0 %v686
        %v996 = vpop.f32.mrb[0].mxu0
        %v997 = vadd.f32 0.0, %v996
        %v998 = vpop.f32.mrb[0].mxu0
        %v999 = vadd.f32 0.0, %v998
        %1000 = vmatprep.mubr.f32.mxu0 0.0
        %1001 = vmatmul.mubr.f32.gmra.mrb[0].mxu0 %v689
        %v1002 = vpop.f32.mrb[0].mxu0
        %v1003 = vadd.f32 0.0, %v1002
        %v1004 = vpop.f32.mrb[0].mxu0
        %v1005 = vadd.f32 0.0, %v1004
        %1006 = vmatprep.mubr.f32.mxu0 0.0
        %1007 = vmatmul.mubr.f32.gmra.mrb[0].mxu0 %v692
        %v1008 = vpop.f32.mrb[0].mxu0
        %v1009 = vadd.f32 0.0, %v1008
        %v1010 = vpop.f32.mrb[0].mxu0
        %v1011 = vadd.f32 0.0, %v1010
        %1012 = vmatprep.mubr.f32.mxu0 0.0
        %1013 = vmatmul.mubr.f32.gmra.mrb[0].mxu0 %v695
        %v1014 = vpop.f32.mrb[0].mxu0
        %v1015 = vadd.f32 0.0, %v1014
        %v1016 = vpop.f32.mrb[0].mxu0
        %v1017 = vadd.f32 0.0, %v1016
        %1018 = vdwg.mxu0
        %v1019 = vld [vmem:[%s3] sm:$0xff]
        %v1020 = vld [vmem:[%s3 + $0x8] sm:$0xff]
        %v1021 = vld [vmem:[%s3 + $0x10] sm:$0xff]
        %v1022 = vld [vmem:[%s3 + $0x18] sm:$0xff]
        %v1023 = vld [vmem:[%s3 + $0x20] sm:$0xff]
        %v1024 = vld [vmem:[%s3 + $0x28] sm:$0xff]
        %v1025 = vld [vmem:[%s3 + $0x30] sm:$0xff]
        %v1026 = vld [vmem:[%s3 + $0x38] sm:$0xff]
        %v1027 = vld [vmem:[%s3 + $0x40] sm:$0xff]
        %v1028 = vld [vmem:[%s3 + $0x48] sm:$0xff]
        %v1029 = vld [vmem:[%s3 + $0x50] sm:$0xff]
        %v1030 = vld [vmem:[%s3 + $0x58] sm:$0xff]
        %v1031 = vld [vmem:[%s3 + $0x60] sm:$0xff]
        %v1032 = vld [vmem:[%s3 + $0x68] sm:$0xff]
        %v1033 = vld [vmem:[%s3 + $0x70] sm:$0xff]
        %v1034 = vld [vmem:[%s3 + $0x78] sm:$0xff]
        %vm1035 = vcmask 130048
        %v1037 = vsel %vm1035, %v1019, 0
        %v1040 = vsel %vm1035, %v1020, 0
        %v1043 = vsel %vm1035, %v1021, 0
        %v1046 = vsel %vm1035, %v1022, 0
        %v1049 = vsel %vm1035, %v1023, 0
        %v1052 = vsel %vm1035, %v1024, 0
        %v1055 = vsel %vm1035, %v1025, 0
        %v1058 = vsel %vm1035, %v1026, 0
        %v1061 = vsel %vm1035, %v1027, 0
        %v1064 = vsel %vm1035, %v1028, 0
        %v1067 = vsel %vm1035, %v1029, 0
        %v1070 = vsel %vm1035, %v1030, 0
        %v1073 = vsel %vm1035, %v1031, 0
        %v1076 = vsel %vm1035, %v1032, 0
        %v1079 = vsel %vm1035, %v1033, 0
        %v1082 = vsel %vm1035, %v1034, 0
        %1084 = vmatprep.subr.mxu0 %v510
        %1085 = vmatpush1.msra.mxu0 %v509
        %1086 = vmatprep.subr.mxu0 %v514
        %1087 = vmatpush1.msra.mxu0 %v513
        %1088 = vmatprep.subr.mxu0 0.0
        %1089 = vmatpush1.msra.mxu0 0.0
        %1090 = vmatprep.subr.mxu0 0.0
        %1091 = vmatpush1.msra.mxu0 0.0
        %1092 = vmatprep.subr.mxu0 0.0
        %1093 = vmatpush1.msra.mxu0 0.0
        %1094 = vmatprep.subr.mxu0 0.0
        %1095 = vmatpush1.msra.mxu0 0.0
        %1096 = vmatprep.subr.mxu0 0.0
        %1097 = vmatpush1.msra.mxu0 0.0
        %1098 = vmatprep.subr.mxu0 0.0
        %1099 = vmatpush1.msra.mxu0 0.0
        %1100 = vmatprep.subr.mxu0 0.0
        %1101 = vmatpush1.msra.mxu0 0.0
        %1102 = vmatprep.subr.mxu0 0.0
        %1103 = vmatpush1.msra.mxu0 0.0
        %1104 = vmatprep.subr.mxu0 0.0
        %1105 = vmatpush1.msra.mxu0 0.0
        %1106 = vmatprep.subr.mxu0 0.0
        %1107 = vmatpush1.msra.mxu0 0.0
        %1108 = vmatprep.subr.mxu0 0.0
        %1109 = vmatpush1.msra.mxu0 0.0
        %1110 = vmatprep.subr.mxu0 0.0
        %1111 = vmatpush1.msra.mxu0 0.0
        %1112 = vmatprep.subr.mxu0 0.0
        %1113 = vmatpush1.msra.mxu0 0.0
        %1114 = vmatprep.subr.mxu0 0.0
        %1115 = vmatpush1.msra.mxu0 0.0
        %1116 = vmatprep.subr.mxu0 0.0
        %1117 = vmatpush1.msra.mxu0 0.0
        %1118 = vmatprep.subr.mxu0 0.0
        %1119 = vmatpush1.msra.mxu0 0.0
        %1120 = vmatprep.subr.mxu0 0.0
        %1121 = vmatpush1.msra.mxu0 0.0
        %1122 = vmatprep.subr.mxu0 0.0
        %1123 = vmatpush1.msra.mxu0 0.0
        %1124 = vmatprep.subr.mxu0 0.0
        %1125 = vmatpush1.msra.mxu0 0.0
        %1126 = vmatprep.subr.mxu0 0.0
        %1127 = vmatpush1.msra.mxu0 0.0
        %1128 = vmatprep.subr.mxu0 0.0
        %1129 = vmatpush1.msra.mxu0 0.0
        %1130 = vmatprep.subr.mxu0 0.0
        %1131 = vmatpush1.msra.mxu0 0.0
        %1132 = vmatprep.subr.mxu0 0.0
        %1133 = vmatpush1.msra.mxu0 0.0
        %1134 = vmatprep.subr.mxu0 0.0
        %1135 = vmatpush1.msra.mxu0 0.0
        %1136 = vmatprep.subr.mxu0 0.0
        %1137 = vmatpush1.msra.mxu0 0.0
        %1138 = vmatprep.subr.mxu0 0.0
        %1139 = vmatpush1.msra.mxu0 0.0
        %1140 = vmatprep.subr.mxu0 0.0
        %1141 = vmatpush1.msra.mxu0 0.0
        %1142 = vmatprep.subr.mxu0 0.0
        %1143 = vmatpush1.msra.mxu0 0.0
        %1144 = vmatprep.subr.mxu0 0.0
        %1145 = vmatpush1.msra.mxu0 0.0
        %1146 = vmatprep.subr.mxu0 0.0
        %1147 = vmatpush1.msra.mxu0 0.0
        %1148 = vmatprep.mubr.f32.mxu0 0.0
        %1149 = vmatmul.mubr.f32.gmra.mrb[0].mxu0 %v1037
        %v1150 = vpop.f32.mrb[0].mxu0
        %v1151 = vadd.f32 0.0, %v1150
        %v1152 = vpop.f32.mrb[0].mxu0
        %v1153 = vadd.f32 0.0, %v1152
        %1154 = vmatprep.mubr.f32.mxu0 0.0
        %1155 = vmatmul.mubr.f32.gmra.mrb[0].mxu0 %v1040
        %v1156 = vpop.f32.mrb[0].mxu0
        %v1157 = vadd.f32 0.0, %v1156
        %v1158 = vpop.f32.mrb[0].mxu0
        %v1159 = vadd.f32 0.0, %v1158
        %1160 = vmatprep.mubr.f32.mxu0 0.0
        %1161 = vmatmul.mubr.f32.gmra.mrb[0].mxu0 %v1043
        %v1162 = vpop.f32.mrb[0].mxu0
        %v1163 = vadd.f32 0.0, %v1162
        %v1164 = vpop.f32.mrb[0].mxu0
        %v1165 = vadd.f32 0.0, %v1164
        %1166 = vmatprep.mubr.f32.mxu0 0.0
        %1167 = vmatmul.mubr.f32.gmra.mrb[0].mxu0 %v1046
        %v1168 = vpop.f32.mrb[0].mxu0
        %v1169 = vadd.f32 0.0, %v1168
        %v1170 = vpop.f32.mrb[0].mxu0
        %v1171 = vadd.f32 0.0, %v1170
        %1172 = vmatprep.mubr.f32.mxu0 0.0
        %1173 = vmatmul.mubr.f32.gmra.mrb[0].mxu0 %v1049
        %v1174 = vpop.f32.mrb[0].mxu0
        %v1175 = vadd.f32 0.0, %v1174
        %v1176 = vpop.f32.mrb[0].mxu0
        %v1177 = vadd.f32 0.0, %v1176
        %1178 = vmatprep.mubr.f32.mxu0 0.0
        %1179 = vmatmul.mubr.f32.gmra.mrb[0].mxu0 %v1052
        %v1180 = vpop.f32.mrb[0].mxu0
        %v1181 = vadd.f32 0.0, %v1180
        %v1182 = vpop.f32.mrb[0].mxu0
        %v1183 = vadd.f32 0.0, %v1182
        %1184 = vmatprep.mubr.f32.mxu0 0.0
        %1185 = vmatmul.mubr.f32.gmra.mrb[0].mxu0 %v1055
        %v1186 = vpop.f32.mrb[0].mxu0
        %v1187 = vadd.f32 0.0, %v1186
        %v1188 = vpop.f32.mrb[0].mxu0
        %v1189 = vadd.f32 0.0, %v1188
        %1190 = vmatprep.mubr.f32.mxu0 0.0
        %1191 = vmatmul.mubr.f32.gmra.mrb[0].mxu0 %v1058
        %v1192 = vpop.f32.mrb[0].mxu0
        %v1193 = vadd.f32 0.0, %v1192
        %v1194 = vpop.f32.mrb[0].mxu0
        %v1195 = vadd.f32 0.0, %v1194
        %1196 = vmatprep.mubr.f32.mxu0 0.0
        %1197 = vmatmul.mubr.f32.gmra.mrb[0].mxu0 %v1061
        %v1198 = vpop.f32.mrb[0].mxu0
        %v1199 = vadd.f32 0.0, %v1198
        %v1200 = vpop.f32.mrb[0].mxu0
        %v1201 = vadd.f32 0.0, %v1200
        %1202 = vmatprep.mubr.f32.mxu0 0.0
        %1203 = vmatmul.mubr.f32.gmra.mrb[0].mxu0 %v1064
        %v1204 = vpop.f32.mrb[0].mxu0
        %v1205 = vadd.f32 0.0, %v1204
        %v1206 = vpop.f32.mrb[0].mxu0
        %v1207 = vadd.f32 0.0, %v1206
        %1208 = vmatprep.mubr.f32.mxu0 0.0
        %1209 = vmatmul.mubr.f32.gmra.mrb[0].mxu0 %v1067
        %v1210 = vpop.f32.mrb[0].mxu0
        %v1211 = vadd.f32 0.0, %v1210
        %v1212 = vpop.f32.mrb[0].mxu0
        %v1213 = vadd.f32 0.0, %v1212
        %1214 = vmatprep.mubr.f32.mxu0 0.0
        %1215 = vmatmul.mubr.f32.gmra.mrb[0].mxu0 %v1070
        %v1216 = vpop.f32.mrb[0].mxu0
        %v1217 = vadd.f32 0.0, %v1216
        %v1218 = vpop.f32.mrb[0].mxu0
        %v1219 = vadd.f32 0.0, %v1218
        %1220 = vmatprep.mubr.f32.mxu0 0.0
        %1221 = vmatmul.mubr.f32.gmra.mrb[0].mxu0 %v1073
        %v1222 = vpop.f32.mrb[0].mxu0
        %v1223 = vadd.f32 0.0, %v1222
        %v1224 = vpop.f32.mrb[0].mxu0
        %v1225 = vadd.f32 0.0, %v1224
        %1226 = vmatprep.mubr.f32.mxu0 0.0
        %1227 = vmatmul.mubr.f32.gmra.mrb[0].mxu0 %v1076
        %v1228 = vpop.f32.mrb[0].mxu0
        %v1229 = vadd.f32 0.0, %v1228
        %v1230 = vpop.f32.mrb[0].mxu0
        %v1231 = vadd.f32 0.0, %v1230
        %1232 = vmatprep.mubr.f32.mxu0 0.0
        %1233 = vmatmul.mubr.f32.gmra.mrb[0].mxu0 %v1079
        %v1234 = vpop.f32.mrb[0].mxu0
        %v1235 = vadd.f32 0.0, %v1234
        %v1236 = vpop.f32.mrb[0].mxu0
        %v1237 = vadd.f32 0.0, %v1236
        %1238 = vmatprep.mubr.f32.mxu0 0.0
        %1239 = vmatmul.mubr.f32.gmra.mrb[0].mxu0 %v1082
        %v1240 = vpop.f32.mrb[0].mxu0
        %v1241 = vadd.f32 0.0, %v1240
        %v1242 = vpop.f32.mrb[0].mxu0
        %v1243 = vadd.f32 0.0, %v1242
        %1244 = vdwg.mxu0
        %1245 = vmatprep.subr.mxu0 %v512
        %1246 = vmatpush1.msra.mxu0 %v511
        %1247 = vmatprep.subr.mxu0 %v516
        %1248 = vmatpush1.msra.mxu0 %v515
        %1249 = vmatprep.subr.mxu0 0.0
        %1250 = vmatpush1.msra.mxu0 0.0
        %1251 = vmatprep.subr.mxu0 0.0
        %1252 = vmatpush1.msra.mxu0 0.0
        %1253 = vmatprep.subr.mxu0 0.0
        %1254 = vmatpush1.msra.mxu0 0.0
        %1255 = vmatprep.subr.mxu0 0.0
        %1256 = vmatpush1.msra.mxu0 0.0
        %1257 = vmatprep.subr.mxu0 0.0
        %1258 = vmatpush1.msra.mxu0 0.0
        %1259 = vmatprep.subr.mxu0 0.0
        %1260 = vmatpush1.msra.mxu0 0.0
        %1261 = vmatprep.subr.mxu0 0.0
        %1262 = vmatpush1.msra.mxu0 0.0
        %1263 = vmatprep.subr.mxu0 0.0
        %1264 = vmatpush1.msra.mxu0 0.0
        %1265 = vmatprep.subr.mxu0 0.0
        %1266 = vmatpush1.msra.mxu0 0.0
        %1267 = vmatprep.subr.mxu0 0.0
        %1268 = vmatpush1.msra.mxu0 0.0
        %1269 = vmatprep.subr.mxu0 0.0
        %1270 = vmatpush1.msra.mxu0 0.0
        %1271 = vmatprep.subr.mxu0 0.0
        %1272 = vmatpush1.msra.mxu0 0.0
        %1273 = vmatprep.subr.mxu0 0.0
        %1274 = vmatpush1.msra.mxu0 0.0
        %1275 = vmatprep.subr.mxu0 0.0
        %1276 = vmatpush1.msra.mxu0 0.0
        %1277 = vmatprep.subr.mxu0 0.0
        %1278 = vmatpush1.msra.mxu0 0.0
        %1279 = vmatprep.subr.mxu0 0.0
        %1280 = vmatpush1.msra.mxu0 0.0
        %1281 = vmatprep.subr.mxu0 0.0
        %1282 = vmatpush1.msra.mxu0 0.0
        %1283 = vmatprep.subr.mxu0 0.0
        %1284 = vmatpush1.msra.mxu0 0.0
        %1285 = vmatprep.subr.mxu0 0.0
        %1286 = vmatpush1.msra.mxu0 0.0
        %1287 = vmatprep.subr.mxu0 0.0
        %1288 = vmatpush1.msra.mxu0 0.0
        %1289 = vmatprep.subr.mxu0 0.0
        %1290 = vmatpush1.msra.mxu0 0.0
        %1291 = vmatprep.subr.mxu0 0.0
        %1292 = vmatpush1.msra.mxu0 0.0
        %1293 = vmatprep.subr.mxu0 0.0
        %1294 = vmatpush1.msra.mxu0 0.0
        %1295 = vmatprep.subr.mxu0 0.0
        %1296 = vmatpush1.msra.mxu0 0.0
        %1297 = vmatprep.subr.mxu0 0.0
        %1298 = vmatpush1.msra.mxu0 0.0
        %1299 = vmatprep.subr.mxu0 0.0
        %1300 = vmatpush1.msra.mxu0 0.0
        %1301 = vmatprep.subr.mxu0 0.0
        %1302 = vmatpush1.msra.mxu0 0.0
        %1303 = vmatprep.subr.mxu0 0.0
        %1304 = vmatpush1.msra.mxu0 0.0
        %1305 = vmatprep.subr.mxu0 0.0
        %1306 = vmatpush1.msra.mxu0 0.0
        %1307 = vmatprep.subr.mxu0 0.0
        %1308 = vmatpush1.msra.mxu0 0.0
        %1309 = vmatprep.mubr.f32.mxu0 0.0
        %1310 = vmatmul.mubr.f32.gmra.mrb[0].mxu0 %v1037
        %v1311 = vpop.f32.mrb[0].mxu0
        %v1312 = vadd.f32 0.0, %v1311
        %v1313 = vpop.f32.mrb[0].mxu0
        %v1314 = vadd.f32 0.0, %v1313
        %1315 = vmatprep.mubr.f32.mxu0 0.0
        %1316 = vmatmul.mubr.f32.gmra.mrb[0].mxu0 %v1040
        %v1317 = vpop.f32.mrb[0].mxu0
        %v1318 = vadd.f32 0.0, %v1317
        %v1319 = vpop.f32.mrb[0].mxu0
        %v1320 = vadd.f32 0.0, %v1319
        %1321 = vmatprep.mubr.f32.mxu0 0.0
        %1322 = vmatmul.mubr.f32.gmra.mrb[0].mxu0 %v1043
        %v1323 = vpop.f32.mrb[0].mxu0
        %v1324 = vadd.f32 0.0, %v1323
        %v1325 = vpop.f32.mrb[0].mxu0
        %v1326 = vadd.f32 0.0, %v1325
        %1327 = vmatprep.mubr.f32.mxu0 0.0
        %1328 = vmatmul.mubr.f32.gmra.mrb[0].mxu0 %v1046
        %v1329 = vpop.f32.mrb[0].mxu0
        %v1330 = vadd.f32 0.0, %v1329
        %v1331 = vpop.f32.mrb[0].mxu0
        %v1332 = vadd.f32 0.0, %v1331
        %1333 = vmatprep.mubr.f32.mxu0 0.0
        %1334 = vmatmul.mubr.f32.gmra.mrb[0].mxu0 %v1049
        %v1335 = vpop.f32.mrb[0].mxu0
        %v1336 = vadd.f32 0.0, %v1335
        %v1337 = vpop.f32.mrb[0].mxu0
        %v1338 = vadd.f32 0.0, %v1337
        %1339 = vmatprep.mubr.f32.mxu0 0.0
        %1340 = vmatmul.mubr.f32.gmra.mrb[0].mxu0 %v1052
        %v1341 = vpop.f32.mrb[0].mxu0
        %v1342 = vadd.f32 0.0, %v1341
        %v1343 = vpop.f32.mrb[0].mxu0
        %v1344 = vadd.f32 0.0, %v1343
        %1345 = vmatprep.mubr.f32.mxu0 0.0
        %1346 = vmatmul.mubr.f32.gmra.mrb[0].mxu0 %v1055
        %v1347 = vpop.f32.mrb[0].mxu0
        %v1348 = vadd.f32 0.0, %v1347
        %v1349 = vpop.f32.mrb[0].mxu0
        %v1350 = vadd.f32 0.0, %v1349
        %1351 = vmatprep.mubr.f32.mxu0 0.0
        %1352 = vmatmul.mubr.f32.gmra.mrb[0].mxu0 %v1058
        %v1353 = vpop.f32.mrb[0].mxu0
        %v1354 = vadd.f32 0.0, %v1353
        %v1355 = vpop.f32.mrb[0].mxu0
        %v1356 = vadd.f32 0.0, %v1355
        %1357 = vmatprep.mubr.f32.mxu0 0.0
        %1358 = vmatmul.mubr.f32.gmra.mrb[0].mxu0 %v1061
        %v1359 = vpop.f32.mrb[0].mxu0
        %v1360 = vadd.f32 0.0, %v1359
        %v1361 = vpop.f32.mrb[0].mxu0
        %v1362 = vadd.f32 0.0, %v1361
        %1363 = vmatprep.mubr.f32.mxu0 0.0
        %1364 = vmatmul.mubr.f32.gmra.mrb[0].mxu0 %v1064
        %v1365 = vpop.f32.mrb[0].mxu0
        %v1366 = vadd.f32 0.0, %v1365
        %v1367 = vpop.f32.mrb[0].mxu0
        %v1368 = vadd.f32 0.0, %v1367
        %1369 = vmatprep.mubr.f32.mxu0 0.0
        %1370 = vmatmul.mubr.f32.gmra.mrb[0].mxu0 %v1067
        %v1371 = vpop.f32.mrb[0].mxu0
        %v1372 = vadd.f32 0.0, %v1371
        %v1373 = vpop.f32.mrb[0].mxu0
        %v1374 = vadd.f32 0.0, %v1373
        %1375 = vmatprep.mubr.f32.mxu0 0.0
        %1376 = vmatmul.mubr.f32.gmra.mrb[0].mxu0 %v1070
        %v1377 = vpop.f32.mrb[0].mxu0
        %v1378 = vadd.f32 0.0, %v1377
        %v1379 = vpop.f32.mrb[0].mxu0
        %v1380 = vadd.f32 0.0, %v1379
        %1381 = vmatprep.mubr.f32.mxu0 0.0
        %1382 = vmatmul.mubr.f32.gmra.mrb[0].mxu0 %v1073
        %v1383 = vpop.f32.mrb[0].mxu0
        %v1384 = vadd.f32 0.0, %v1383
        %v1385 = vpop.f32.mrb[0].mxu0
        %v1386 = vadd.f32 0.0, %v1385
        %1387 = vmatprep.mubr.f32.mxu0 0.0
        %1388 = vmatmul.mubr.f32.gmra.mrb[0].mxu0 %v1076
        %v1389 = vpop.f32.mrb[0].mxu0
        %v1390 = vadd.f32 0.0, %v1389
        %v1391 = vpop.f32.mrb[0].mxu0
        %v1392 = vadd.f32 0.0, %v1391
        %1393 = vmatprep.mubr.f32.mxu0 0.0
        %1394 = vmatmul.mubr.f32.gmra.mrb[0].mxu0 %v1079
        %v1395 = vpop.f32.mrb[0].mxu0
        %v1396 = vadd.f32 0.0, %v1395
        %v1397 = vpop.f32.mrb[0].mxu0
        %v1398 = vadd.f32 0.0, %v1397
        %1399 = vmatprep.mubr.f32.mxu0 0.0
        %1400 = vmatmul.mubr.f32.gmra.mrb[0].mxu0 %v1082
        %v1401 = vpop.f32.mrb[0].mxu0
        %v1402 = vadd.f32 0.0, %v1401
        %v1403 = vpop.f32.mrb[0].mxu0
        %v1404 = vadd.f32 0.0, %v1403
        %1405 = vdwg.mxu0
        %v1406 = vmul.f32 %v764, %v1151
        %v1407 = vmul.f32 %v766, %v1153
        %v1408 = vmul.f32 %v925, %v1312
        %v1409 = vmul.f32 %v927, %v1314
        %v1410 = vmul.f32 %v770, %v1157
        %v1411 = vmul.f32 %v772, %v1159
        %v1412 = vmul.f32 %v931, %v1318
        %v1413 = vmul.f32 %v933, %v1320
        %v1414 = vmul.f32 %v776, %v1163
        %v1415 = vmul.f32 %v778, %v1165
        %v1416 = vmul.f32 %v937, %v1324
        %v1417 = vmul.f32 %v939, %v1326
        %v1418 = vmul.f32 %v782, %v1169
        %v1419 = vmul.f32 %v784, %v1171
        %v1420 = vmul.f32 %v943, %v1330
        %v1421 = vmul.f32 %v945, %v1332
        %v1422 = vmul.f32 %v788, %v1175
        %v1423 = vmul.f32 %v790, %v1177
        %v1424 = vmul.f32 %v949, %v1336
        %v1425 = vmul.f32 %v951, %v1338
        %v1426 = vmul.f32 %v794, %v1181
        %v1427 = vmul.f32 %v796, %v1183
        %v1428 = vmul.f32 %v955, %v1342
        %v1429 = vmul.f32 %v957, %v1344
        %v1430 = vmul.f32 %v800, %v1187
        %v1431 = vmul.f32 %v802, %v1189
        %v1432 = vmul.f32 %v961, %v1348
        %v1433 = vmul.f32 %v963, %v1350
        %v1434 = vmul.f32 %v806, %v1193
        %v1435 = vmul.f32 %v808, %v1195
        %v1436 = vmul.f32 %v967, %v1354
        %v1437 = vmul.f32 %v969, %v1356
        %v1438 = vmul.f32 %v812, %v1199
        %v1439 = vmul.f32 %v814, %v1201
        %v1440 = vmul.f32 %v973, %v1360
        %v1441 = vmul.f32 %v975, %v1362
        %v1442 = vmul.f32 %v818, %v1205
        %v1443 = vmul.f32 %v820, %v1207
        %v1444 = vmul.f32 %v979, %v1366
        %v1445 = vmul.f32 %v981, %v1368
        %v1446 = vmul.f32 %v824, %v1211
        %v1447 = vmul.f32 %v826, %v1213
        %v1448 = vmul.f32 %v985, %v1372
        %v1449 = vmul.f32 %v987, %v1374
        %v1450 = vmul.f32 %v830, %v1217
        %v1451 = vmul.f32 %v832, %v1219
        %v1452 = vmul.f32 %v991, %v1378
        %v1453 = vmul.f32 %v993, %v1380
        %v1454 = vmul.f32 %v836, %v1223
        %v1455 = vmul.f32 %v838, %v1225
        %v1456 = vmul.f32 %v997, %v1384
        %v1457 = vmul.f32 %v999, %v1386
        %v1458 = vmul.f32 %v842, %v1229
        %v1459 = vmul.f32 %v844, %v1231
        %v1460 = vmul.f32 %v1003, %v1390
        %v1461 = vmul.f32 %v1005, %v1392
        %v1462 = vmul.f32 %v848, %v1235
        %v1463 = vmul.f32 %v850, %v1237
        %v1464 = vmul.f32 %v1009, %v1396
        %v1465 = vmul.f32 %v1011, %v1398
        %v1466 = vmul.f32 %v854, %v1241
        %v1467 = vmul.f32 %v856, %v1243
        %v1468 = vmul.f32 %v1015, %v1402
        %v1469 = vmul.f32 %v1017, %v1404
        %v1470 = vld [vmem:[%s4] sm:$0xff]
        %v1471 = vld [vmem:[%s4 + $0x8] sm:$0xff]
        %v1472 = vld [vmem:[%s4 + $0x10] sm:$0xff]
        %v1473 = vld [vmem:[%s4 + $0x18] sm:$0xff]
        %v1474 = vld [vmem:[%s4 + $0x20] sm:$0xff]
        %v1475 = vld [vmem:[%s4 + $0x28] sm:$0xff]
        %v1476 = vld [vmem:[%s4 + $0x30] sm:$0xff]
        %v1477 = vld [vmem:[%s4 + $0x38] sm:$0xff]
        %v1478 = vld [vmem:[%s4 + $0x40] sm:$0xff]
        %v1479 = vld [vmem:[%s4 + $0x48] sm:$0xff]
        %v1480 = vld [vmem:[%s4 + $0x50] sm:$0xff]
        %v1481 = vld [vmem:[%s4 + $0x58] sm:$0xff]
        %v1482 = vld [vmem:[%s4 + $0x60] sm:$0xff]
        %v1483 = vld [vmem:[%s4 + $0x68] sm:$0xff]
        %v1484 = vld [vmem:[%s4 + $0x70] sm:$0xff]
        %v1485 = vld [vmem:[%s4 + $0x78] sm:$0xff]
        %v1486 = vld [vmem:[%s4 + $0x80] sm:$0xff]
        %v1487 = vld [vmem:[%s4 + $0x88] sm:$0xff]
        %v1488 = vld [vmem:[%s4 + $0x90] sm:$0xff]
        %v1489 = vld [vmem:[%s4 + $0x98] sm:$0xff]
        %v1490 = vld [vmem:[%s4 + $0xa0] sm:$0xff]
        %v1491 = vld [vmem:[%s4 + $0xa8] sm:$0xff]
        %v1492 = vld [vmem:[%s4 + $0xb0] sm:$0xff]
        %v1493 = vld [vmem:[%s4 + $0xb8] sm:$0xff]
        %v1494 = vld [vmem:[%s4 + $0xc0] sm:$0xff]
        %v1495 = vld [vmem:[%s4 + $0xc8] sm:$0xff]
        %v1496 = vld [vmem:[%s4 + $0xd0] sm:$0xff]
        %v1497 = vld [vmem:[%s4 + $0xd8] sm:$0xff]
        %v1498 = vld [vmem:[%s4 + $0xe0] sm:$0xff]
        %v1499 = vld [vmem:[%s4 + $0xe8] sm:$0xff]
        %v1500 = vld [vmem:[%s4 + $0xf0] sm:$0xff]
        %v1501 = vld [vmem:[%s4 + $0xf8] sm:$0xff]
        %1502 = vmatprep.subr.mxu0 %v1407
        %1503 = vmatpush1.msra.mxu0 %v1406
        %1504 = vmatprep.subr.mxu0 %v1411
        %1505 = vmatpush1.msra.mxu0 %v1410
        %1506 = vmatprep.subr.mxu0 %v1415
        %1507 = vmatpush1.msra.mxu0 %v1414
        %1508 = vmatprep.subr.mxu0 %v1419
        %1509 = vmatpush1.msra.mxu0 %v1418
        %1510 = vmatprep.subr.mxu0 %v1423
        %1511 = vmatpush1.msra.mxu0 %v1422
        %1512 = vmatprep.subr.mxu0 %v1427
        %1513 = vmatpush1.msra.mxu0 %v1426
        %1514 = vmatprep.subr.mxu0 %v1431
        %1515 = vmatpush1.msra.mxu0 %v1430
        %1516 = vmatprep.subr.mxu0 %v1435
        %1517 = vmatpush1.msra.mxu0 %v1434
        %1518 = vmatprep.subr.mxu0 %v1439
        %1519 = vmatpush1.msra.mxu0 %v1438
        %1520 = vmatprep.subr.mxu0 %v1443
        %1521 = vmatpush1.msra.mxu0 %v1442
        %1522 = vmatprep.subr.mxu0 %v1447
        %1523 = vmatpush1.msra.mxu0 %v1446
        %1524 = vmatprep.subr.mxu0 %v1451
        %1525 = vmatpush1.msra.mxu0 %v1450
        %1526 = vmatprep.subr.mxu0 %v1455
        %1527 = vmatpush1.msra.mxu0 %v1454
        %1528 = vmatprep.subr.mxu0 %v1459
        %1529 = vmatpush1.msra.mxu0 %v1458
        %1530 = vmatprep.subr.mxu0 %v1463
        %1531 = vmatpush1.msra.mxu0 %v1462
        %1532 = vmatprep.subr.mxu0 %v1467
        %1533 = vmatpush1.msra.mxu0 %v1466
        %1534 = vmatprep.subr.mxu0 0.0
        %1535 = vmatpush1.msra.mxu0 0.0
        %1536 = vmatprep.subr.mxu0 0.0
        %1537 = vmatpush1.msra.mxu0 0.0
        %1538 = vmatprep.subr.mxu0 0.0
        %1539 = vmatpush1.msra.mxu0 0.0
        %1540 = vmatprep.subr.mxu0 0.0
        %1541 = vmatpush1.msra.mxu0 0.0
        %1542 = vmatprep.subr.mxu0 0.0
        %1543 = vmatpush1.msra.mxu0 0.0
        %1544 = vmatprep.subr.mxu0 0.0
        %1545 = vmatpush1.msra.mxu0 0.0
        %1546 = vmatprep.subr.mxu0 0.0
        %1547 = vmatpush1.msra.mxu0 0.0
        %1548 = vmatprep.subr.mxu0 0.0
        %1549 = vmatpush1.msra.mxu0 0.0
        %1550 = vmatprep.subr.mxu0 0.0
        %1551 = vmatpush1.msra.mxu0 0.0
        %1552 = vmatprep.subr.mxu0 0.0
        %1553 = vmatpush1.msra.mxu0 0.0
        %1554 = vmatprep.subr.mxu0 0.0
        %1555 = vmatpush1.msra.mxu0 0.0
        %1556 = vmatprep.subr.mxu0 0.0
        %1557 = vmatpush1.msra.mxu0 0.0
        %1558 = vmatprep.subr.mxu0 0.0
        %1559 = vmatpush1.msra.mxu0 0.0
        %1560 = vmatprep.subr.mxu0 0.0
        %1561 = vmatpush1.msra.mxu0 0.0
        %1562 = vmatprep.subr.mxu0 0.0
        %1563 = vmatpush1.msra.mxu0 0.0
        %1564 = vmatprep.subr.mxu0 0.0
        %1565 = vmatpush1.msra.mxu0 0.0
        %1566 = vmatprep.mubr.f32.mxu0 0.0
        %1567 = vmatmul.mubr.f32.gmra.mrb[0].mxu0 %v1470
        %v1568 = vpop.f32.mrb[0].mxu0
        %v1569 = vadd.f32 0.0, %v1568
        %v1570 = vpop.f32.mrb[0].mxu0
        %v1571 = vadd.f32 0.0, %v1570
        %1572 = vmatprep.mubr.f32.mxu0 0.0
        %1573 = vmatmul.mubr.f32.gmra.mrb[0].mxu0 %v1471
        %v1574 = vpop.f32.mrb[0].mxu0
        %v1575 = vadd.f32 0.0, %v1574
        %v1576 = vpop.f32.mrb[0].mxu0
        %v1577 = vadd.f32 0.0, %v1576
        %1578 = vmatprep.mubr.f32.mxu0 0.0
        %1579 = vmatmul.mubr.f32.gmra.mrb[0].mxu0 %v1472
        %v1580 = vpop.f32.mrb[0].mxu0
        %v1581 = vadd.f32 0.0, %v1580
        %v1582 = vpop.f32.mrb[0].mxu0
        %v1583 = vadd.f32 0.0, %v1582
        %1584 = vmatprep.mubr.f32.mxu0 0.0
        %1585 = vmatmul.mubr.f32.gmra.mrb[0].mxu0 %v1473
        %v1586 = vpop.f32.mrb[0].mxu0
        %v1587 = vadd.f32 0.0, %v1586
        %v1588 = vpop.f32.mrb[0].mxu0
        %v1589 = vadd.f32 0.0, %v1588
        %1590 = vmatprep.mubr.f32.mxu0 0.0
        %1591 = vmatmul.mubr.f32.gmra.mrb[0].mxu0 %v1474
        %v1592 = vpop.f32.mrb[0].mxu0
        %v1593 = vadd.f32 0.0, %v1592
        %v1594 = vpop.f32.mrb[0].mxu0
        %v1595 = vadd.f32 0.0, %v1594
        %1596 = vmatprep.mubr.f32.mxu0 0.0
        %1597 = vmatmul.mubr.f32.gmra.mrb[0].mxu0 %v1475
        %v1598 = vpop.f32.mrb[0].mxu0
        %v1599 = vadd.f32 0.0, %v1598
        %v1600 = vpop.f32.mrb[0].mxu0
        %v1601 = vadd.f32 0.0, %v1600
        %1602 = vmatprep.mubr.f32.mxu0 0.0
        %1603 = vmatmul.mubr.f32.gmra.mrb[0].mxu0 %v1476
        %v1604 = vpop.f32.mrb[0].mxu0
        %v1605 = vadd.f32 0.0, %v1604
        %v1606 = vpop.f32.mrb[0].mxu0
        %v1607 = vadd.f32 0.0, %v1606
        %1608 = vmatprep.mubr.f32.mxu0 0.0
        %1609 = vmatmul.mubr.f32.gmra.mrb[0].mxu0 %v1477
        %v1610 = vpop.f32.mrb[0].mxu0
        %v1611 = vadd.f32 0.0, %v1610
        %v1612 = vpop.f32.mrb[0].mxu0
        %v1613 = vadd.f32 0.0, %v1612
        %1614 = vmatprep.mubr.f32.mxu0 0.0
        %1615 = vmatmul.mubr.f32.gmra.mrb[0].mxu0 %v1478
        %v1616 = vpop.f32.mrb[0].mxu0
        %v1617 = vadd.f32 0.0, %v1616
        %v1618 = vpop.f32.mrb[0].mxu0
        %v1619 = vadd.f32 0.0, %v1618
        %1620 = vmatprep.mubr.f32.mxu0 0.0
        %1621 = vmatmul.mubr.f32.gmra.mrb[0].mxu0 %v1479
        %v1622 = vpop.f32.mrb[0].mxu0
        %v1623 = vadd.f32 0.0, %v1622
        %v1624 = vpop.f32.mrb[0].mxu0
        %v1625 = vadd.f32 0.0, %v1624
        %1626 = vmatprep.mubr.f32.mxu0 0.0
        %1627 = vmatmul.mubr.f32.gmra.mrb[0].mxu0 %v1480
        %v1628 = vpop.f32.mrb[0].mxu0
        %v1629 = vadd.f32 0.0, %v1628
        %v1630 = vpop.f32.mrb[0].mxu0
        %v1631 = vadd.f32 0.0, %v1630
        %1632 = vmatprep.mubr.f32.mxu0 0.0
        %1633 = vmatmul.mubr.f32.gmra.mrb[0].mxu0 %v1481
        %v1634 = vpop.f32.mrb[0].mxu0
        %v1635 = vadd.f32 0.0, %v1634
        %v1636 = vpop.f32.mrb[0].mxu0
        %v1637 = vadd.f32 0.0, %v1636
        %1638 = vmatprep.mubr.f32.mxu0 0.0
        %1639 = vmatmul.mubr.f32.gmra.mrb[0].mxu0 %v1482
        %v1640 = vpop.f32.mrb[0].mxu0
        %v1641 = vadd.f32 0.0, %v1640
        %v1642 = vpop.f32.mrb[0].mxu0
        %v1643 = vadd.f32 0.0, %v1642
        %1644 = vmatprep.mubr.f32.mxu0 0.0
        %1645 = vmatmul.mubr.f32.gmra.mrb[0].mxu0 %v1483
        %v1646 = vpop.f32.mrb[0].mxu0
        %v1647 = vadd.f32 0.0, %v1646
        %v1648 = vpop.f32.mrb[0].mxu0
        %v1649 = vadd.f32 0.0, %v1648
        %1650 = vmatprep.mubr.f32.mxu0 0.0
        %1651 = vmatmul.mubr.f32.gmra.mrb[0].mxu0 %v1484
        %v1652 = vpop.f32.mrb[0].mxu0
        %v1653 = vadd.f32 0.0, %v1652
        %v1654 = vpop.f32.mrb[0].mxu0
        %v1655 = vadd.f32 0.0, %v1654
        %1656 = vmatprep.mubr.f32.mxu0 0.0
        %1657 = vmatmul.mubr.f32.gmra.mrb[0].mxu0 %v1485
        %v1658 = vpop.f32.mrb[0].mxu0
        %v1659 = vadd.f32 0.0, %v1658
        %v1660 = vpop.f32.mrb[0].mxu0
        %v1661 = vadd.f32 0.0, %v1660
        %1662 = vmatprep.mubr.f32.mxu0 0.0
        %1663 = vmatmul.mubr.f32.gmra.mrb[0].mxu0 %v1486
        %v1664 = vpop.f32.mrb[0].mxu0
        %v1665 = vadd.f32 0.0, %v1664
        %v1666 = vpop.f32.mrb[0].mxu0
        %v1667 = vadd.f32 0.0, %v1666
        %1668 = vmatprep.mubr.f32.mxu0 0.0
        %1669 = vmatmul.mubr.f32.gmra.mrb[0].mxu0 %v1487
        %v1670 = vpop.f32.mrb[0].mxu0
        %v1671 = vadd.f32 0.0, %v1670
        %v1672 = vpop.f32.mrb[0].mxu0
        %v1673 = vadd.f32 0.0, %v1672
        %1674 = vmatprep.mubr.f32.mxu0 0.0
        %1675 = vmatmul.mubr.f32.gmra.mrb[0].mxu0 %v1488
        %v1676 = vpop.f32.mrb[0].mxu0
        %v1677 = vadd.f32 0.0, %v1676
        %v1678 = vpop.f32.mrb[0].mxu0
        %v1679 = vadd.f32 0.0, %v1678
        %1680 = vmatprep.mubr.f32.mxu0 0.0
        %1681 = vmatmul.mubr.f32.gmra.mrb[0].mxu0 %v1489
        %v1682 = vpop.f32.mrb[0].mxu0
        %v1683 = vadd.f32 0.0, %v1682
        %v1684 = vpop.f32.mrb[0].mxu0
        %v1685 = vadd.f32 0.0, %v1684
        %1686 = vmatprep.mubr.f32.mxu0 0.0
        %1687 = vmatmul.mubr.f32.gmra.mrb[0].mxu0 %v1490
        %v1688 = vpop.f32.mrb[0].mxu0
        %v1689 = vadd.f32 0.0, %v1688
        %v1690 = vpop.f32.mrb[0].mxu0
        %v1691 = vadd.f32 0.0, %v1690
        %1692 = vmatprep.mubr.f32.mxu0 0.0
        %1693 = vmatmul.mubr.f32.gmra.mrb[0].mxu0 %v1491
        %v1694 = vpop.f32.mrb[0].mxu0
        %v1695 = vadd.f32 0.0, %v1694
        %v1696 = vpop.f32.mrb[0].mxu0
        %v1697 = vadd.f32 0.0, %v1696
        %1698 = vmatprep.mubr.f32.mxu0 0.0
        %1699 = vmatmul.mubr.f32.gmra.mrb[0].mxu0 %v1492
        %v1700 = vpop.f32.mrb[0].mxu0
        %v1701 = vadd.f32 0.0, %v1700
        %v1702 = vpop.f32.mrb[0].mxu0
        %v1703 = vadd.f32 0.0, %v1702
        %1704 = vmatprep.mubr.f32.mxu0 0.0
        %1705 = vmatmul.mubr.f32.gmra.mrb[0].mxu0 %v1493
        %v1706 = vpop.f32.mrb[0].mxu0
        %v1707 = vadd.f32 0.0, %v1706
        %v1708 = vpop.f32.mrb[0].mxu0
        %v1709 = vadd.f32 0.0, %v1708
        %1710 = vmatprep.mubr.f32.mxu0 0.0
        %1711 = vmatmul.mubr.f32.gmra.mrb[0].mxu0 %v1494
        %v1712 = vpop.f32.mrb[0].mxu0
        %v1713 = vadd.f32 0.0, %v1712
        %v1714 = vpop.f32.mrb[0].mxu0
        %v1715 = vadd.f32 0.0, %v1714
        %1716 = vmatprep.mubr.f32.mxu0 0.0
        %1717 = vmatmul.mubr.f32.gmra.mrb[0].mxu0 %v1495
        %v1718 = vpop.f32.mrb[0].mxu0
        %v1719 = vadd.f32 0.0, %v1718
        %v1720 = vpop.f32.mrb[0].mxu0
        %v1721 = vadd.f32 0.0, %v1720
        %1722 = vmatprep.mubr.f32.mxu0 0.0
        %1723 = vmatmul.mubr.f32.gmra.mrb[0].mxu0 %v1496
        %v1724 = vpop.f32.mrb[0].mxu0
        %v1725 = vadd.f32 0.0, %v1724
        %v1726 = vpop.f32.mrb[0].mxu0
        %v1727 = vadd.f32 0.0, %v1726
        %1728 = vmatprep.mubr.f32.mxu0 0.0
        %1729 = vmatmul.mubr.f32.gmra.mrb[0].mxu0 %v1497
        %v1730 = vpop.f32.mrb[0].mxu0
        %v1731 = vadd.f32 0.0, %v1730
        %v1732 = vpop.f32.mrb[0].mxu0
        %v1733 = vadd.f32 0.0, %v1732
        %1734 = vmatprep.mubr.f32.mxu0 0.0
        %1735 = vmatmul.mubr.f32.gmra.mrb[0].mxu0 %v1498
        %v1736 = vpop.f32.mrb[0].mxu0
        %v1737 = vadd.f32 0.0, %v1736
        %v1738 = vpop.f32.mrb[0].mxu0
        %v1739 = vadd.f32 0.0, %v1738
        %1740 = vmatprep.mubr.f32.mxu0 0.0
        %1741 = vmatmul.mubr.f32.gmra.mrb[0].mxu0 %v1499
        %v1742 = vpop.f32.mrb[0].mxu0
        %v1743 = vadd.f32 0.0, %v1742
        %v1744 = vpop.f32.mrb[0].mxu0
        %v1745 = vadd.f32 0.0, %v1744
        %1746 = vmatprep.mubr.f32.mxu0 0.0
        %1747 = vmatmul.mubr.f32.gmra.mrb[0].mxu0 %v1500
        %v1748 = vpop.f32.mrb[0].mxu0
        %v1749 = vadd.f32 0.0, %v1748
        %v1750 = vpop.f32.mrb[0].mxu0
        %v1751 = vadd.f32 0.0, %v1750
        %1752 = vmatprep.mubr.f32.mxu0 0.0
        %1753 = vmatmul.mubr.f32.gmra.mrb[0].mxu0 %v1501
        %v1754 = vpop.f32.mrb[0].mxu0
        %v1755 = vadd.f32 0.0, %v1754
        %v1756 = vpop.f32.mrb[0].mxu0
        %v1757 = vadd.f32 0.0, %v1756
        %1758 = vdwg.mxu0
        %1759 = vmatprep.subr.mxu0 %v1409
        %1760 = vmatpush1.msra.mxu0 %v1408
        %1761 = vmatprep.subr.mxu0 %v1413
        %1762 = vmatpush1.msra.mxu0 %v1412
        %1763 = vmatprep.subr.mxu0 %v1417
        %1764 = vmatpush1.msra.mxu0 %v1416
        %1765 = vmatprep.subr.mxu0 %v1421
        %1766 = vmatpush1.msra.mxu0 %v1420
        %1767 = vmatprep.subr.mxu0 %v1425
        %1768 = vmatpush1.msra.mxu0 %v1424
        %1769 = vmatprep.subr.mxu0 %v1429
        %1770 = vmatpush1.msra.mxu0 %v1428
        %1771 = vmatprep.subr.mxu0 %v1433
        %1772 = vmatpush1.msra.mxu0 %v1432
        %1773 = vmatprep.subr.mxu0 %v1437
        %1774 = vmatpush1.msra.mxu0 %v1436
        %1775 = vmatprep.subr.mxu0 %v1441
        %1776 = vmatpush1.msra.mxu0 %v1440
        %1777 = vmatprep.subr.mxu0 %v1445
        %1778 = vmatpush1.msra.mxu0 %v1444
        %1779 = vmatprep.subr.mxu0 %v1449
        %1780 = vmatpush1.msra.mxu0 %v1448
        %1781 = vmatprep.subr.mxu0 %v1453
        %1782 = vmatpush1.msra.mxu0 %v1452
        %1783 = vmatprep.subr.mxu0 %v1457
        %1784 = vmatpush1.msra.mxu0 %v1456
        %1785 = vmatprep.subr.mxu0 %v1461
        %1786 = vmatpush1.msra.mxu0 %v1460
        %1787 = vmatprep.subr.mxu0 %v1465
        %1788 = vmatpush1.msra.mxu0 %v1464
        %1789 = vmatprep.subr.mxu0 %v1469
        %1790 = vmatpush1.msra.mxu0 %v1468
        %1791 = vmatprep.subr.mxu0 0.0
        %1792 = vmatpush1.msra.mxu0 0.0
        %1793 = vmatprep.subr.mxu0 0.0
        %1794 = vmatpush1.msra.mxu0 0.0
        %1795 = vmatprep.subr.mxu0 0.0
        %1796 = vmatpush1.msra.mxu0 0.0
        %1797 = vmatprep.subr.mxu0 0.0
        %1798 = vmatpush1.msra.mxu0 0.0
        %1799 = vmatprep.subr.mxu0 0.0
        %1800 = vmatpush1.msra.mxu0 0.0
        %1801 = vmatprep.subr.mxu0 0.0
        %1802 = vmatpush1.msra.mxu0 0.0
        %1803 = vmatprep.subr.mxu0 0.0
        %1804 = vmatpush1.msra.mxu0 0.0
        %1805 = vmatprep.subr.mxu0 0.0
        %1806 = vmatpush1.msra.mxu0 0.0
        %1807 = vmatprep.subr.mxu0 0.0
        %1808 = vmatpush1.msra.mxu0 0.0
        %1809 = vmatprep.subr.mxu0 0.0
        %1810 = vmatpush1.msra.mxu0 0.0
        %1811 = vmatprep.subr.mxu0 0.0
        %1812 = vmatpush1.msra.mxu0 0.0
        %1813 = vmatprep.subr.mxu0 0.0
        %1814 = vmatpush1.msra.mxu0 0.0
        %1815 = vmatprep.subr.mxu0 0.0
        %1816 = vmatpush1.msra.mxu0 0.0
        %1817 = vmatprep.subr.mxu0 0.0
        %1818 = vmatpush1.msra.mxu0 0.0
        %1819 = vmatprep.subr.mxu0 0.0
        %1820 = vmatpush1.msra.mxu0 0.0
        %1821 = vmatprep.subr.mxu0 0.0
        %1822 = vmatpush1.msra.mxu0 0.0
        %1823 = vmatprep.mubr.f32.mxu0 0.0
        %1824 = vmatmul.mubr.f32.gmra.mrb[0].mxu0 %v1470
        %v1825 = vpop.f32.mrb[0].mxu0
        %v1826 = vadd.f32 0.0, %v1825
        %v1827 = vpop.f32.mrb[0].mxu0
        %v1828 = vadd.f32 0.0, %v1827
        %1829 = vmatprep.mubr.f32.mxu0 0.0
        %1830 = vmatmul.mubr.f32.gmra.mrb[0].mxu0 %v1471
        %v1831 = vpop.f32.mrb[0].mxu0
        %v1832 = vadd.f32 0.0, %v1831
        %v1833 = vpop.f32.mrb[0].mxu0
        %v1834 = vadd.f32 0.0, %v1833
        %1835 = vmatprep.mubr.f32.mxu0 0.0
        %1836 = vmatmul.mubr.f32.gmra.mrb[0].mxu0 %v1472
        %v1837 = vpop.f32.mrb[0].mxu0
        %v1838 = vadd.f32 0.0, %v1837
        %v1839 = vpop.f32.mrb[0].mxu0
        %v1840 = vadd.f32 0.0, %v1839
        %1841 = vmatprep.mubr.f32.mxu0 0.0
        %1842 = vmatmul.mubr.f32.gmra.mrb[0].mxu0 %v1473
        %v1843 = vpop.f32.mrb[0].mxu0
        %v1844 = vadd.f32 0.0, %v1843
        %v1845 = vpop.f32.mrb[0].mxu0
        %v1846 = vadd.f32 0.0, %v1845
        %1847 = vmatprep.mubr.f32.mxu0 0.0
        %1848 = vmatmul.mubr.f32.gmra.mrb[0].mxu0 %v1474
        %v1849 = vpop.f32.mrb[0].mxu0
        %v1850 = vadd.f32 0.0, %v1849
        %v1851 = vpop.f32.mrb[0].mxu0
        %v1852 = vadd.f32 0.0, %v1851
        %1853 = vmatprep.mubr.f32.mxu0 0.0
        %1854 = vmatmul.mubr.f32.gmra.mrb[0].mxu0 %v1475
        %v1855 = vpop.f32.mrb[0].mxu0
        %v1856 = vadd.f32 0.0, %v1855
        %v1857 = vpop.f32.mrb[0].mxu0
        %v1858 = vadd.f32 0.0, %v1857
        %1859 = vmatprep.mubr.f32.mxu0 0.0
        %1860 = vmatmul.mubr.f32.gmra.mrb[0].mxu0 %v1476
        %v1861 = vpop.f32.mrb[0].mxu0
        %v1862 = vadd.f32 0.0, %v1861
        %v1863 = vpop.f32.mrb[0].mxu0
        %v1864 = vadd.f32 0.0, %v1863
        %1865 = vmatprep.mubr.f32.mxu0 0.0
        %1866 = vmatmul.mubr.f32.gmra.mrb[0].mxu0 %v1477
        %v1867 = vpop.f32.mrb[0].mxu0
        %v1868 = vadd.f32 0.0, %v1867
        %v1869 = vpop.f32.mrb[0].mxu0
        %v1870 = vadd.f32 0.0, %v1869
        %1871 = vmatprep.mubr.f32.mxu0 0.0
        %1872 = vmatmul.mubr.f32.gmra.mrb[0].mxu0 %v1478
        %v1873 = vpop.f32.mrb[0].mxu0
        %v1874 = vadd.f32 0.0, %v1873
        %v1875 = vpop.f32.mrb[0].mxu0
        %v1876 = vadd.f32 0.0, %v1875
        %1877 = vmatprep.mubr.f32.mxu0 0.0
        %1878 = vmatmul.mubr.f32.gmra.mrb[0].mxu0 %v1479
        %v1879 = vpop.f32.mrb[0].mxu0
        %v1880 = vadd.f32 0.0, %v1879
        %v1881 = vpop.f32.mrb[0].mxu0
        %v1882 = vadd.f32 0.0, %v1881
        %1883 = vmatprep.mubr.f32.mxu0 0.0
        %1884 = vmatmul.mubr.f32.gmra.mrb[0].mxu0 %v1480
        %v1885 = vpop.f32.mrb[0].mxu0
        %v1886 = vadd.f32 0.0, %v1885
        %v1887 = vpop.f32.mrb[0].mxu0
        %v1888 = vadd.f32 0.0, %v1887
        %1889 = vmatprep.mubr.f32.mxu0 0.0
        %1890 = vmatmul.mubr.f32.gmra.mrb[0].mxu0 %v1481
        %v1891 = vpop.f32.mrb[0].mxu0
        %v1892 = vadd.f32 0.0, %v1891
        %v1893 = vpop.f32.mrb[0].mxu0
        %v1894 = vadd.f32 0.0, %v1893
        %1895 = vmatprep.mubr.f32.mxu0 0.0
        %1896 = vmatmul.mubr.f32.gmra.mrb[0].mxu0 %v1482
        %v1897 = vpop.f32.mrb[0].mxu0
        %v1898 = vadd.f32 0.0, %v1897
        %v1899 = vpop.f32.mrb[0].mxu0
        %v1900 = vadd.f32 0.0, %v1899
        %1901 = vmatprep.mubr.f32.mxu0 0.0
        %1902 = vmatmul.mubr.f32.gmra.mrb[0].mxu0 %v1483
        %v1903 = vpop.f32.mrb[0].mxu0
        %v1904 = vadd.f32 0.0, %v1903
        %v1905 = vpop.f32.mrb[0].mxu0
        %v1906 = vadd.f32 0.0, %v1905
        %1907 = vmatprep.mubr.f32.mxu0 0.0
        %1908 = vmatmul.mubr.f32.gmra.mrb[0].mxu0 %v1484
        %v1909 = vpop.f32.mrb[0].mxu0
        %v1910 = vadd.f32 0.0, %v1909
        %v1911 = vpop.f32.mrb[0].mxu0
        %v1912 = vadd.f32 0.0, %v1911
        %1913 = vmatprep.mubr.f32.mxu0 0.0
        %1914 = vmatmul.mubr.f32.gmra.mrb[0].mxu0 %v1485
        %v1915 = vpop.f32.mrb[0].mxu0
        %v1916 = vadd.f32 0.0, %v1915
        %v1917 = vpop.f32.mrb[0].mxu0
        %v1918 = vadd.f32 0.0, %v1917
        %1919 = vmatprep.mubr.f32.mxu0 0.0
        %1920 = vmatmul.mubr.f32.gmra.mrb[0].mxu0 %v1486
        %v1921 = vpop.f32.mrb[0].mxu0
        %v1922 = vadd.f32 0.0, %v1921
        %v1923 = vpop.f32.mrb[0].mxu0
        %v1924 = vadd.f32 0.0, %v1923
        %1925 = vmatprep.mubr.f32.mxu0 0.0
        %1926 = vmatmul.mubr.f32.gmra.mrb[0].mxu0 %v1487
        %v1927 = vpop.f32.mrb[0].mxu0
        %v1928 = vadd.f32 0.0, %v1927
        %v1929 = vpop.f32.mrb[0].mxu0
        %v1930 = vadd.f32 0.0, %v1929
        %1931 = vmatprep.mubr.f32.mxu0 0.0
        %1932 = vmatmul.mubr.f32.gmra.mrb[0].mxu0 %v1488
        %v1933 = vpop.f32.mrb[0].mxu0
        %v1934 = vadd.f32 0.0, %v1933
        %v1935 = vpop.f32.mrb[0].mxu0
        %v1936 = vadd.f32 0.0, %v1935
        %1937 = vmatprep.mubr.f32.mxu0 0.0
        %1938 = vmatmul.mubr.f32.gmra.mrb[0].mxu0 %v1489
        %v1939 = vpop.f32.mrb[0].mxu0
        %v1940 = vadd.f32 0.0, %v1939
        %v1941 = vpop.f32.mrb[0].mxu0
        %v1942 = vadd.f32 0.0, %v1941
        %1943 = vmatprep.mubr.f32.mxu0 0.0
        %1944 = vmatmul.mubr.f32.gmra.mrb[0].mxu0 %v1490
        %v1945 = vpop.f32.mrb[0].mxu0
        %v1946 = vadd.f32 0.0, %v1945
        %v1947 = vpop.f32.mrb[0].mxu0
        %v1948 = vadd.f32 0.0, %v1947
        %1949 = vmatprep.mubr.f32.mxu0 0.0
        %1950 = vmatmul.mubr.f32.gmra.mrb[0].mxu0 %v1491
        %v1951 = vpop.f32.mrb[0].mxu0
        %v1952 = vadd.f32 0.0, %v1951
        %v1953 = vpop.f32.mrb[0].mxu0
        %v1954 = vadd.f32 0.0, %v1953
        %1955 = vmatprep.mubr.f32.mxu0 0.0
        %1956 = vmatmul.mubr.f32.gmra.mrb[0].mxu0 %v1492
        %v1957 = vpop.f32.mrb[0].mxu0
        %v1958 = vadd.f32 0.0, %v1957
        %v1959 = vpop.f32.mrb[0].mxu0
        %v1960 = vadd.f32 0.0, %v1959
        %1961 = vmatprep.mubr.f32.mxu0 0.0
        %1962 = vmatmul.mubr.f32.gmra.mrb[0].mxu0 %v1493
        %v1963 = vpop.f32.mrb[0].mxu0
        %v1964 = vadd.f32 0.0, %v1963
        %v1965 = vpop.f32.mrb[0].mxu0
        %v1966 = vadd.f32 0.0, %v1965
        %1967 = vmatprep.mubr.f32.mxu0 0.0
        %1968 = vmatmul.mubr.f32.gmra.mrb[0].mxu0 %v1494
        %v1969 = vpop.f32.mrb[0].mxu0
        %v1970 = vadd.f32 0.0, %v1969
        %v1971 = vpop.f32.mrb[0].mxu0
        %v1972 = vadd.f32 0.0, %v1971
        %1973 = vmatprep.mubr.f32.mxu0 0.0
        %1974 = vmatmul.mubr.f32.gmra.mrb[0].mxu0 %v1495
        %v1975 = vpop.f32.mrb[0].mxu0
        %v1976 = vadd.f32 0.0, %v1975
        %v1977 = vpop.f32.mrb[0].mxu0
        %v1978 = vadd.f32 0.0, %v1977
        %1979 = vmatprep.mubr.f32.mxu0 0.0
        %1980 = vmatmul.mubr.f32.gmra.mrb[0].mxu0 %v1496
        %v1981 = vpop.f32.mrb[0].mxu0
        %v1982 = vadd.f32 0.0, %v1981
        %v1983 = vpop.f32.mrb[0].mxu0
        %v1984 = vadd.f32 0.0, %v1983
        %1985 = vmatprep.mubr.f32.mxu0 0.0
        %1986 = vmatmul.mubr.f32.gmra.mrb[0].mxu0 %v1497
        %v1987 = vpop.f32.mrb[0].mxu0
        %v1988 = vadd.f32 0.0, %v1987
        %v1989 = vpop.f32.mrb[0].mxu0
        %v1990 = vadd.f32 0.0, %v1989
        %1991 = vmatprep.mubr.f32.mxu0 0.0
        %1992 = vmatmul.mubr.f32.gmra.mrb[0].mxu0 %v1498
        %v1993 = vpop.f32.mrb[0].mxu0
        %v1994 = vadd.f32 0.0, %v1993
        %v1995 = vpop.f32.mrb[0].mxu0
        %v1996 = vadd.f32 0.0, %v1995
        %1997 = vmatprep.mubr.f32.mxu0 0.0
        %1998 = vmatmul.mubr.f32.gmra.mrb[0].mxu0 %v1499
        %v1999 = vpop.f32.mrb[0].mxu0
        %v2000 = vadd.f32 0.0, %v1999
        %v2001 = vpop.f32.mrb[0].mxu0
        %v2002 = vadd.f32 0.0, %v2001
        %2003 = vmatprep.mubr.f32.mxu0 0.0
        %2004 = vmatmul.mubr.f32.gmra.mrb[0].mxu0 %v1500
        %v2005 = vpop.f32.mrb[0].mxu0
        %v2006 = vadd.f32 0.0, %v2005
        %v2007 = vpop.f32.mrb[0].mxu0
        %v2008 = vadd.f32 0.0, %v2007
        %2009 = vmatprep.mubr.f32.mxu0 0.0
        %2010 = vmatmul.mubr.f32.gmra.mrb[0].mxu0 %v1501
        %v2011 = vpop.f32.mrb[0].mxu0
        %v2012 = vadd.f32 0.0, %v2011
        %v2013 = vpop.f32.mrb[0].mxu0
        %v2014 = vadd.f32 0.0, %v2013
        %2015 = vdwg.mxu0
        %v2016 = vlaneseq
        %v2017 = vshrl.u32 %v2016, 7
        %v2018 = vsub.s32 0, %v2017
        %v2019 = vrot.slane %v624, %v2018
        %v2020 = vlaneseq
        %v2021 = vshrl.u32 %v2020, 7
        %v2022 = vsub.s32 0, %v2021
        %v2023 = vrot.slane %v625, %v2022
        %v2024 = vlaneseq
        %v2025 = vshrl.u32 %v2024, 7
        %v2026 = vsub.s32 0, %v2025
        %v2027 = vrot.slane %v626, %v2026
        %v2028 = vlaneseq
        %v2029 = vshrl.u32 %v2028, 7
        %v2030 = vsub.s32 0, %v2029
        %v2031 = vrot.slane %v627, %v2030
        %v2032 = vmul.f32 %v2019, %v1569
        %v2033 = vmul.f32 %v2023, %v1571
        %v2034 = vmul.f32 %v2027, %v1826
        %v2035 = vmul.f32 %v2031, %v1828
        %v2036 = vmul.f32 %v2019, %v1575
        %v2037 = vmul.f32 %v2023, %v1577
        %v2038 = vmul.f32 %v2027, %v1832
        %v2039 = vmul.f32 %v2031, %v1834
        %v2040 = vadd.f32 %v2032, 0.0
        %v2041 = vadd.f32 %v2033, 0.0
        %v2042 = vadd.f32 %v2034, 0.0
        %v2043 = vadd.f32 %v2035, 0.0
        %v2044 = vadd.f32 %v2036, 0.0
        %v2045 = vadd.f32 %v2037, 0.0
        %v2046 = vadd.f32 %v2038, 0.0
        %v2047 = vadd.f32 %v2039, 0.0
        %v2048 = vlaneseq
        %v2049 = vshrl.u32 %v2048, 7
        %v2050 = vsub.s32 1, %v2049
        %v2051 = vrot.slane %v624, %v2050
        %v2052 = vlaneseq
        %v2053 = vshrl.u32 %v2052, 7
        %v2054 = vsub.s32 1, %v2053
        %v2055 = vrot.slane %v625, %v2054
        %v2056 = vlaneseq
        %v2057 = vshrl.u32 %v2056, 7
        %v2058 = vsub.s32 1, %v2057
        %v2059 = vrot.slane %v626, %v2058
        %v2060 = vlaneseq
        %v2061 = vshrl.u32 %v2060, 7
        %v2062 = vsub.s32 1, %v2061
        %v2063 = vrot.slane %v627, %v2062
        %v2064 = vmul.f32 %v2051, %v1581
        %v2065 = vmul.f32 %v2055, %v1583
        %v2066 = vmul.f32 %v2059, %v1838
        %v2067 = vmul.f32 %v2063, %v1840
        %v2068 = vmul.f32 %v2051, %v1587
        %v2069 = vmul.f32 %v2055, %v1589
        %v2070 = vmul.f32 %v2059, %v1844
        %v2071 = vmul.f32 %v2063, %v1846
        %v2072 = vadd.f32 %v2040, %v2064
        %v2073 = vadd.f32 %v2041, %v2065
        %v2074 = vadd.f32 %v2042, %v2066
        %v2075 = vadd.f32 %v2043, %v2067
        %v2076 = vadd.f32 %v2044, %v2068
        %v2077 = vadd.f32 %v2045, %v2069
        %v2078 = vadd.f32 %v2046, %v2070
        %v2079 = vadd.f32 %v2047, %v2071
        %v2080 = vlaneseq
        %v2081 = vshrl.u32 %v2080, 7
        %v2082 = vsub.s32 2, %v2081
        %v2083 = vrot.slane %v624, %v2082
        %v2084 = vlaneseq
        %v2085 = vshrl.u32 %v2084, 7
        %v2086 = vsub.s32 2, %v2085
        %v2087 = vrot.slane %v625, %v2086
        %v2088 = vlaneseq
        %v2089 = vshrl.u32 %v2088, 7
        %v2090 = vsub.s32 2, %v2089
        %v2091 = vrot.slane %v626, %v2090
        %v2092 = vlaneseq
        %v2093 = vshrl.u32 %v2092, 7
        %v2094 = vsub.s32 2, %v2093
        %v2095 = vrot.slane %v627, %v2094
        %v2096 = vmul.f32 %v2083, %v1593
        %v2097 = vmul.f32 %v2087, %v1595
        %v2098 = vmul.f32 %v2091, %v1850
        %v2099 = vmul.f32 %v2095, %v1852
        %v2100 = vmul.f32 %v2083, %v1599
        %v2101 = vmul.f32 %v2087, %v1601
        %v2102 = vmul.f32 %v2091, %v1856
        %v2103 = vmul.f32 %v2095, %v1858
        %v2104 = vadd.f32 %v2072, %v2096
        %v2105 = vadd.f32 %v2073, %v2097
        %v2106 = vadd.f32 %v2074, %v2098
        %v2107 = vadd.f32 %v2075, %v2099
        %v2108 = vadd.f32 %v2076, %v2100
        %v2109 = vadd.f32 %v2077, %v2101
        %v2110 = vadd.f32 %v2078, %v2102
        %v2111 = vadd.f32 %v2079, %v2103
        %v2112 = vlaneseq
        %v2113 = vshrl.u32 %v2112, 7
        %v2114 = vsub.s32 3, %v2113
        %v2115 = vrot.slane %v624, %v2114
        %v2116 = vlaneseq
        %v2117 = vshrl.u32 %v2116, 7
        %v2118 = vsub.s32 3, %v2117
        %v2119 = vrot.slane %v625, %v2118
        %v2120 = vlaneseq
        %v2121 = vshrl.u32 %v2120, 7
        %v2122 = vsub.s32 3, %v2121
        %v2123 = vrot.slane %v626, %v2122
        %v2124 = vlaneseq
        %v2125 = vshrl.u32 %v2124, 7
        %v2126 = vsub.s32 3, %v2125
        %v2127 = vrot.slane %v627, %v2126
        %v2128 = vmul.f32 %v2115, %v1605
        %v2129 = vmul.f32 %v2119, %v1607
        %v2130 = vmul.f32 %v2123, %v1862
        %v2131 = vmul.f32 %v2127, %v1864
        %v2132 = vmul.f32 %v2115, %v1611
        %v2133 = vmul.f32 %v2119, %v1613
        %v2134 = vmul.f32 %v2123, %v1868
        %v2135 = vmul.f32 %v2127, %v1870
        %v2136 = vadd.f32 %v2104, %v2128
        %v2137 = vadd.f32 %v2105, %v2129
        %v2138 = vadd.f32 %v2106, %v2130
        %v2139 = vadd.f32 %v2107, %v2131
        %v2140 = vadd.f32 %v2108, %v2132
        %v2141 = vadd.f32 %v2109, %v2133
        %v2142 = vadd.f32 %v2110, %v2134
        %v2143 = vadd.f32 %v2111, %v2135
        %v2144 = vlaneseq
        %v2145 = vshrl.u32 %v2144, 7
        %v2146 = vsub.s32 4, %v2145
        %v2147 = vrot.slane %v624, %v2146
        %v2148 = vlaneseq
        %v2149 = vshrl.u32 %v2148, 7
        %v2150 = vsub.s32 4, %v2149
        %v2151 = vrot.slane %v625, %v2150
        %v2152 = vlaneseq
        %v2153 = vshrl.u32 %v2152, 7
        %v2154 = vsub.s32 4, %v2153
        %v2155 = vrot.slane %v626, %v2154
        %v2156 = vlaneseq
        %v2157 = vshrl.u32 %v2156, 7
        %v2158 = vsub.s32 4, %v2157
        %v2159 = vrot.slane %v627, %v2158
        %v2160 = vmul.f32 %v2147, %v1617
        %v2161 = vmul.f32 %v2151, %v1619
        %v2162 = vmul.f32 %v2155, %v1874
        %v2163 = vmul.f32 %v2159, %v1876
        %v2164 = vmul.f32 %v2147, %v1623
        %v2165 = vmul.f32 %v2151, %v1625
        %v2166 = vmul.f32 %v2155, %v1880
        %v2167 = vmul.f32 %v2159, %v1882
        %v2168 = vadd.f32 %v2136, %v2160
        %v2169 = vadd.f32 %v2137, %v2161
        %v2170 = vadd.f32 %v2138, %v2162
        %v2171 = vadd.f32 %v2139, %v2163
        %v2172 = vadd.f32 %v2140, %v2164
        %v2173 = vadd.f32 %v2141, %v2165
        %v2174 = vadd.f32 %v2142, %v2166
        %v2175 = vadd.f32 %v2143, %v2167
        %v2176 = vlaneseq
        %v2177 = vshrl.u32 %v2176, 7
        %v2178 = vsub.s32 5, %v2177
        %v2179 = vrot.slane %v624, %v2178
        %v2180 = vlaneseq
        %v2181 = vshrl.u32 %v2180, 7
        %v2182 = vsub.s32 5, %v2181
        %v2183 = vrot.slane %v625, %v2182
        %v2184 = vlaneseq
        %v2185 = vshrl.u32 %v2184, 7
        %v2186 = vsub.s32 5, %v2185
        %v2187 = vrot.slane %v626, %v2186
        %v2188 = vlaneseq
        %v2189 = vshrl.u32 %v2188, 7
        %v2190 = vsub.s32 5, %v2189
        %v2191 = vrot.slane %v627, %v2190
        %v2192 = vmul.f32 %v2179, %v1629
        %v2193 = vmul.f32 %v2183, %v1631
        %v2194 = vmul.f32 %v2187, %v1886
        %v2195 = vmul.f32 %v2191, %v1888
        %v2196 = vmul.f32 %v2179, %v1635
        %v2197 = vmul.f32 %v2183, %v1637
        %v2198 = vmul.f32 %v2187, %v1892
        %v2199 = vmul.f32 %v2191, %v1894
        %v2200 = vadd.f32 %v2168, %v2192
        %v2201 = vadd.f32 %v2169, %v2193
        %v2202 = vadd.f32 %v2170, %v2194
        %v2203 = vadd.f32 %v2171, %v2195
        %v2204 = vadd.f32 %v2172, %v2196
        %v2205 = vadd.f32 %v2173, %v2197
        %v2206 = vadd.f32 %v2174, %v2198
        %v2207 = vadd.f32 %v2175, %v2199
        %v2208 = vlaneseq
        %v2209 = vshrl.u32 %v2208, 7
        %v2210 = vsub.s32 6, %v2209
        %v2211 = vrot.slane %v624, %v2210
        %v2212 = vlaneseq
        %v2213 = vshrl.u32 %v2212, 7
        %v2214 = vsub.s32 6, %v2213
        %v2215 = vrot.slane %v625, %v2214
        %v2216 = vlaneseq
        %v2217 = vshrl.u32 %v2216, 7
        %v2218 = vsub.s32 6, %v2217
        %v2219 = vrot.slane %v626, %v2218
        %v2220 = vlaneseq
        %v2221 = vshrl.u32 %v2220, 7
        %v2222 = vsub.s32 6, %v2221
        %v2223 = vrot.slane %v627, %v2222
        %v2224 = vmul.f32 %v2211, %v1641
        %v2225 = vmul.f32 %v2215, %v1643
        %v2226 = vmul.f32 %v2219, %v1898
        %v2227 = vmul.f32 %v2223, %v1900
        %v2228 = vmul.f32 %v2211, %v1647
        %v2229 = vmul.f32 %v2215, %v1649
        %v2230 = vmul.f32 %v2219, %v1904
        %v2231 = vmul.f32 %v2223, %v1906
        %v2232 = vadd.f32 %v2200, %v2224
        %v2233 = vadd.f32 %v2201, %v2225
        %v2234 = vadd.f32 %v2202, %v2226
        %v2235 = vadd.f32 %v2203, %v2227
        %v2236 = vadd.f32 %v2204, %v2228
        %v2237 = vadd.f32 %v2205, %v2229
        %v2238 = vadd.f32 %v2206, %v2230
        %v2239 = vadd.f32 %v2207, %v2231
        %v2240 = vlaneseq
        %v2241 = vshrl.u32 %v2240, 7
        %v2242 = vsub.s32 7, %v2241
        %v2243 = vrot.slane %v624, %v2242
        %v2244 = vlaneseq
        %v2245 = vshrl.u32 %v2244, 7
        %v2246 = vsub.s32 7, %v2245
        %v2247 = vrot.slane %v625, %v2246
        %v2248 = vlaneseq
        %v2249 = vshrl.u32 %v2248, 7
        %v2250 = vsub.s32 7, %v2249
        %v2251 = vrot.slane %v626, %v2250
        %v2252 = vlaneseq
        %v2253 = vshrl.u32 %v2252, 7
        %v2254 = vsub.s32 7, %v2253
        %v2255 = vrot.slane %v627, %v2254
        %v2256 = vmul.f32 %v2243, %v1653
        %v2257 = vmul.f32 %v2247, %v1655
        %v2258 = vmul.f32 %v2251, %v1910
        %v2259 = vmul.f32 %v2255, %v1912
        %v2260 = vmul.f32 %v2243, %v1659
        %v2261 = vmul.f32 %v2247, %v1661
        %v2262 = vmul.f32 %v2251, %v1916
        %v2263 = vmul.f32 %v2255, %v1918
        %v2264 = vadd.f32 %v2232, %v2256
        %v2265 = vadd.f32 %v2233, %v2257
        %v2266 = vadd.f32 %v2234, %v2258
        %v2267 = vadd.f32 %v2235, %v2259
        %v2268 = vadd.f32 %v2236, %v2260
        %v2269 = vadd.f32 %v2237, %v2261
        %v2270 = vadd.f32 %v2238, %v2262
        %v2271 = vadd.f32 %v2239, %v2263
        %v2272 = vlaneseq
        %v2273 = vshrl.u32 %v2272, 7
        %v2274 = vsub.s32 0, %v2273
        %v2275 = vrot.slane %v628, %v2274
        %v2276 = vlaneseq
        %v2277 = vshrl.u32 %v2276, 7
        %v2278 = vsub.s32 0, %v2277
        %v2279 = vrot.slane %v629, %v2278
        %v2280 = vlaneseq
        %v2281 = vshrl.u32 %v2280, 7
        %v2282 = vsub.s32 0, %v2281
        %v2283 = vrot.slane %v630, %v2282
        %v2284 = vlaneseq
        %v2285 = vshrl.u32 %v2284, 7
        %v2286 = vsub.s32 0, %v2285
        %v2287 = vrot.slane %v631, %v2286
        %v2288 = vmul.f32 %v2275, %v1665
        %v2289 = vmul.f32 %v2279, %v1667
        %v2290 = vmul.f32 %v2283, %v1922
        %v2291 = vmul.f32 %v2287, %v1924
        %v2292 = vmul.f32 %v2275, %v1671
        %v2293 = vmul.f32 %v2279, %v1673
        %v2294 = vmul.f32 %v2283, %v1928
        %v2295 = vmul.f32 %v2287, %v1930
        %v2296 = vadd.f32 %v2264, %v2288
        %v2297 = vadd.f32 %v2265, %v2289
        %v2298 = vadd.f32 %v2266, %v2290
        %v2299 = vadd.f32 %v2267, %v2291
        %v2300 = vadd.f32 %v2268, %v2292
        %v2301 = vadd.f32 %v2269, %v2293
        %v2302 = vadd.f32 %v2270, %v2294
        %v2303 = vadd.f32 %v2271, %v2295
        %v2304 = vlaneseq
        %v2305 = vshrl.u32 %v2304, 7
        %v2306 = vsub.s32 1, %v2305
        %v2307 = vrot.slane %v628, %v2306
        %v2308 = vlaneseq
        %v2309 = vshrl.u32 %v2308, 7
        %v2310 = vsub.s32 1, %v2309
        %v2311 = vrot.slane %v629, %v2310
        %v2312 = vlaneseq
        %v2313 = vshrl.u32 %v2312, 7
        %v2314 = vsub.s32 1, %v2313
        %v2315 = vrot.slane %v630, %v2314
        %v2316 = vlaneseq
        %v2317 = vshrl.u32 %v2316, 7
        %v2318 = vsub.s32 1, %v2317
        %v2319 = vrot.slane %v631, %v2318
        %v2320 = vmul.f32 %v2307, %v1677
        %v2321 = vmul.f32 %v2311, %v1679
        %v2322 = vmul.f32 %v2315, %v1934
        %v2323 = vmul.f32 %v2319, %v1936
        %v2324 = vmul.f32 %v2307, %v1683
        %v2325 = vmul.f32 %v2311, %v1685
        %v2326 = vmul.f32 %v2315, %v1940
        %v2327 = vmul.f32 %v2319, %v1942
        %v2328 = vadd.f32 %v2296, %v2320
        %v2329 = vadd.f32 %v2297, %v2321
        %v2330 = vadd.f32 %v2298, %v2322
        %v2331 = vadd.f32 %v2299, %v2323
        %v2332 = vadd.f32 %v2300, %v2324
        %v2333 = vadd.f32 %v2301, %v2325
        %v2334 = vadd.f32 %v2302, %v2326
        %v2335 = vadd.f32 %v2303, %v2327
        %v2336 = vlaneseq
        %v2337 = vshrl.u32 %v2336, 7
        %v2338 = vsub.s32 2, %v2337
        %v2339 = vrot.slane %v628, %v2338
        %v2340 = vlaneseq
        %v2341 = vshrl.u32 %v2340, 7
        %v2342 = vsub.s32 2, %v2341
        %v2343 = vrot.slane %v629, %v2342
        %v2344 = vlaneseq
        %v2345 = vshrl.u32 %v2344, 7
        %v2346 = vsub.s32 2, %v2345
        %v2347 = vrot.slane %v630, %v2346
        %v2348 = vlaneseq
        %v2349 = vshrl.u32 %v2348, 7
        %v2350 = vsub.s32 2, %v2349
        %v2351 = vrot.slane %v631, %v2350
        %v2352 = vmul.f32 %v2339, %v1689
        %v2353 = vmul.f32 %v2343, %v1691
        %v2354 = vmul.f32 %v2347, %v1946
        %v2355 = vmul.f32 %v2351, %v1948
        %v2356 = vmul.f32 %v2339, %v1695
        %v2357 = vmul.f32 %v2343, %v1697
        %v2358 = vmul.f32 %v2347, %v1952
        %v2359 = vmul.f32 %v2351, %v1954
        %v2360 = vadd.f32 %v2328, %v2352
        %v2361 = vadd.f32 %v2329, %v2353
        %v2362 = vadd.f32 %v2330, %v2354
        %v2363 = vadd.f32 %v2331, %v2355
        %v2364 = vadd.f32 %v2332, %v2356
        %v2365 = vadd.f32 %v2333, %v2357
        %v2366 = vadd.f32 %v2334, %v2358
        %v2367 = vadd.f32 %v2335, %v2359
        %v2368 = vlaneseq
        %v2369 = vshrl.u32 %v2368, 7
        %v2370 = vsub.s32 3, %v2369
        %v2371 = vrot.slane %v628, %v2370
        %v2372 = vlaneseq
        %v2373 = vshrl.u32 %v2372, 7
        %v2374 = vsub.s32 3, %v2373
        %v2375 = vrot.slane %v629, %v2374
        %v2376 = vlaneseq
        %v2377 = vshrl.u32 %v2376, 7
        %v2378 = vsub.s32 3, %v2377
        %v2379 = vrot.slane %v630, %v2378
        %v2380 = vlaneseq
        %v2381 = vshrl.u32 %v2380, 7
        %v2382 = vsub.s32 3, %v2381
        %v2383 = vrot.slane %v631, %v2382
        %v2384 = vmul.f32 %v2371, %v1701
        %v2385 = vmul.f32 %v2375, %v1703
        %v2386 = vmul.f32 %v2379, %v1958
        %v2387 = vmul.f32 %v2383, %v1960
        %v2388 = vmul.f32 %v2371, %v1707
        %v2389 = vmul.f32 %v2375, %v1709
        %v2390 = vmul.f32 %v2379, %v1964
        %v2391 = vmul.f32 %v2383, %v1966
        %v2392 = vadd.f32 %v2360, %v2384
        %v2393 = vadd.f32 %v2361, %v2385
        %v2394 = vadd.f32 %v2362, %v2386
        %v2395 = vadd.f32 %v2363, %v2387
        %v2396 = vadd.f32 %v2364, %v2388
        %v2397 = vadd.f32 %v2365, %v2389
        %v2398 = vadd.f32 %v2366, %v2390
        %v2399 = vadd.f32 %v2367, %v2391
        %v2400 = vlaneseq
        %v2401 = vshrl.u32 %v2400, 7
        %v2402 = vsub.s32 4, %v2401
        %v2403 = vrot.slane %v628, %v2402
        %v2404 = vlaneseq
        %v2405 = vshrl.u32 %v2404, 7
        %v2406 = vsub.s32 4, %v2405
        %v2407 = vrot.slane %v629, %v2406
        %v2408 = vlaneseq
        %v2409 = vshrl.u32 %v2408, 7
        %v2410 = vsub.s32 4, %v2409
        %v2411 = vrot.slane %v630, %v2410
        %v2412 = vlaneseq
        %v2413 = vshrl.u32 %v2412, 7
        %v2414 = vsub.s32 4, %v2413
        %v2415 = vrot.slane %v631, %v2414
        %v2416 = vmul.f32 %v2403, %v1713
        %v2417 = vmul.f32 %v2407, %v1715
        %v2418 = vmul.f32 %v2411, %v1970
        %v2419 = vmul.f32 %v2415, %v1972
        %v2420 = vmul.f32 %v2403, %v1719
        %v2421 = vmul.f32 %v2407, %v1721
        %v2422 = vmul.f32 %v2411, %v1976
        %v2423 = vmul.f32 %v2415, %v1978
        %v2424 = vadd.f32 %v2392, %v2416
        %v2425 = vadd.f32 %v2393, %v2417
        %v2426 = vadd.f32 %v2394, %v2418
        %v2427 = vadd.f32 %v2395, %v2419
        %v2428 = vadd.f32 %v2396, %v2420
        %v2429 = vadd.f32 %v2397, %v2421
        %v2430 = vadd.f32 %v2398, %v2422
        %v2431 = vadd.f32 %v2399, %v2423
        %v2432 = vlaneseq
        %v2433 = vshrl.u32 %v2432, 7
        %v2434 = vsub.s32 5, %v2433
        %v2435 = vrot.slane %v628, %v2434
        %v2436 = vlaneseq
        %v2437 = vshrl.u32 %v2436, 7
        %v2438 = vsub.s32 5, %v2437
        %v2439 = vrot.slane %v629, %v2438
        %v2440 = vlaneseq
        %v2441 = vshrl.u32 %v2440, 7
        %v2442 = vsub.s32 5, %v2441
        %v2443 = vrot.slane %v630, %v2442
        %v2444 = vlaneseq
        %v2445 = vshrl.u32 %v2444, 7
        %v2446 = vsub.s32 5, %v2445
        %v2447 = vrot.slane %v631, %v2446
        %v2448 = vmul.f32 %v2435, %v1725
        %v2449 = vmul.f32 %v2439, %v1727
        %v2450 = vmul.f32 %v2443, %v1982
        %v2451 = vmul.f32 %v2447, %v1984
        %v2452 = vmul.f32 %v2435, %v1731
        %v2453 = vmul.f32 %v2439, %v1733
        %v2454 = vmul.f32 %v2443, %v1988
        %v2455 = vmul.f32 %v2447, %v1990
        %v2456 = vadd.f32 %v2424, %v2448
        %v2457 = vadd.f32 %v2425, %v2449
        %v2458 = vadd.f32 %v2426, %v2450
        %v2459 = vadd.f32 %v2427, %v2451
        %v2460 = vadd.f32 %v2428, %v2452
        %v2461 = vadd.f32 %v2429, %v2453
        %v2462 = vadd.f32 %v2430, %v2454
        %v2463 = vadd.f32 %v2431, %v2455
        %v2464 = vlaneseq
        %v2465 = vshrl.u32 %v2464, 7
        %v2466 = vsub.s32 6, %v2465
        %v2467 = vrot.slane %v628, %v2466
        %v2468 = vlaneseq
        %v2469 = vshrl.u32 %v2468, 7
        %v2470 = vsub.s32 6, %v2469
        %v2471 = vrot.slane %v629, %v2470
        %v2472 = vlaneseq
        %v2473 = vshrl.u32 %v2472, 7
        %v2474 = vsub.s32 6, %v2473
        %v2475 = vrot.slane %v630, %v2474
        %v2476 = vlaneseq
        %v2477 = vshrl.u32 %v2476, 7
        %v2478 = vsub.s32 6, %v2477
        %v2479 = vrot.slane %v631, %v2478
        %v2480 = vmul.f32 %v2467, %v1737
        %v2481 = vmul.f32 %v2471, %v1739
        %v2482 = vmul.f32 %v2475, %v1994
        %v2483 = vmul.f32 %v2479, %v1996
        %v2484 = vmul.f32 %v2467, %v1743
        %v2485 = vmul.f32 %v2471, %v1745
        %v2486 = vmul.f32 %v2475, %v2000
        %v2487 = vmul.f32 %v2479, %v2002
        %v2488 = vadd.f32 %v2456, %v2480
        %v2489 = vadd.f32 %v2457, %v2481
        %v2490 = vadd.f32 %v2458, %v2482
        %v2491 = vadd.f32 %v2459, %v2483
        %v2492 = vadd.f32 %v2460, %v2484
        %v2493 = vadd.f32 %v2461, %v2485
        %v2494 = vadd.f32 %v2462, %v2486
        %v2495 = vadd.f32 %v2463, %v2487
        %v2496 = vlaneseq
        %v2497 = vshrl.u32 %v2496, 7
        %v2498 = vsub.s32 7, %v2497
        %v2499 = vrot.slane %v628, %v2498
        %v2500 = vlaneseq
        %v2501 = vshrl.u32 %v2500, 7
        %v2502 = vsub.s32 7, %v2501
        %v2503 = vrot.slane %v629, %v2502
        %v2504 = vlaneseq
        %v2505 = vshrl.u32 %v2504, 7
        %v2506 = vsub.s32 7, %v2505
        %v2507 = vrot.slane %v630, %v2506
        %v2508 = vlaneseq
        %v2509 = vshrl.u32 %v2508, 7
        %v2510 = vsub.s32 7, %v2509
        %v2511 = vrot.slane %v631, %v2510
        %v2512 = vmul.f32 %v2499, %v1749
        %v2513 = vmul.f32 %v2503, %v1751
        %v2514 = vmul.f32 %v2507, %v2006
        %v2515 = vmul.f32 %v2511, %v2008
        %v2516 = vmul.f32 %v2499, %v1755
        %v2517 = vmul.f32 %v2503, %v1757
        %v2518 = vmul.f32 %v2507, %v2012
        %v2519 = vmul.f32 %v2511, %v2014
        %v2520 = vadd.f32 %v2488, %v2512
        %v2521 = vadd.f32 %v2489, %v2513
        %v2522 = vadd.f32 %v2490, %v2514
        %v2523 = vadd.f32 %v2491, %v2515
        %v2524 = vadd.f32 %v2492, %v2516
        %v2525 = vadd.f32 %v2493, %v2517
        %v2526 = vadd.f32 %v2494, %v2518
        %v2527 = vadd.f32 %v2495, %v2519
        %2528 = vst [vmem:[%s254] sm:$0xff] %v2520
        %2529 = vst [vmem:[%s254 + $0x8] sm:$0xff] %v2521
        %2530 = vst [vmem:[%s254 + $0x10] sm:$0xff] %v2522
        %2531 = vst [vmem:[%s254 + $0x18] sm:$0xff] %v2523
        %2532 = vst [vmem:[%s254 + $0x20] sm:$0xff] %v2524
        %2533 = vst [vmem:[%s254 + $0x28] sm:$0xff] %v2525
        %2534 = vst [vmem:[%s254 + $0x30] sm:$0xff] %v2526
        %2535 = vst [vmem:[%s254 + $0x38] sm:$0xff] %v2527
        %s2536 = sand.u32 %s141, 1
        %s2537 = scalar_lea.sflag [#allocation4], %s2536
        %s2538 = sand.u32 %s141, 1
        %s2539 = smul.addr %s2538, 64
        %s2540 = scalar_lea.vmem [#allocation7], %s2539
        // Predicated region
        $region49: #{tpu_custom_call.1} parent=39 // pred_check
          %p2541 = pneg %p151
        $region50: #{tpu_custom_call.1} parent=39 // pred_check_branch
          %2543 = sbr.rel (%p2541) target = $region52
        $region51: #{tpu_custom_call.1} parent=39 // pred_region
          %s2544 = smul.u32 4, %s23
          %s2546 = ssub.s32 1024, 1024
          %2547 = vsyncadd %s2537, %s2546
          %s2548 = smul.addr %s2544, 128
          %s2549 = scalar_lea.hbm %s5, %s2548
          %s2550 = sshll.u32 %s2540, 4
          %s2551 = int_to_ptr.vmem [resolvable:$true] %s2550
          %2556 = dma.vmem_to_hbm [thread:$0]  %s2551, 1024, %s2549, %s2537, 512, 1024, 32
        $region52: #{tpu_custom_call.1} parent=39 // pred_fallthru
          _
      $region40: #{tpu_custom_call.1} parent=5 // pred_fallthru
        _
      %p2557 = scmp.le.s32.totalorder 2, %s18
      // Predicated region
      $region53: #{tpu_custom_call.1} parent=5 // pred_check
        %p2558 = pneg %p2557
      $region54: #{tpu_custom_call.1} parent=5 // pred_check_branch
        %2560 = sbr.rel (%p2558) target = $region56
      $region55: #{tpu_custom_call.1} parent=5 // pred_region
        %s2561 = ssub.s32 %s18, 2
        // Predicated region
        $region57: #{tpu_custom_call.1} parent=55 // pred_check
          %p2562 = pneg %p157
        $region58: #{tpu_custom_call.1} parent=55 // pred_check_branch
          %2564 = sbr.rel (%p2562) target = $region60
        $region59: #{tpu_custom_call.1} parent=55 // pred_region
          %s2565 = sand.u32 %s142, 1
          %s2566 = scalar_lea.sflag [#allocation4], %s2565
          %s2567 = sand.u32 %s142, 1
          %s2568 = smul.addr %s2567, 64
          %s2569 = scalar_lea.vmem [#allocation7], %s2568
          %2570 = dma.done %s2566, 1024
        $region60: #{tpu_custom_call.1} parent=55 // pred_fallthru
          _
      $region56: #{tpu_custom_call.1} parent=5 // pred_fallthru
        _
    $region6: #{tpu_custom_call.1} parent=1 // loop_footer
      %s22 = sadd.s32 1, %s18
    $region7: #{tpu_custom_call.1} parent=1 // loop_footer_branch
      %17 = sbr.rel target = $region3
    $region8: #{tpu_custom_call.1} parent=1 // loop_exit
      _
    %2571 = vsyncpa [#allocation3], 1
    %s2572 = scalar_lea.sflag [#allocation3], 1
    %2573 = vsyncpa %s2572, 1
    %2574 = vsyncpa [#allocation4], 1
    %s2575 = scalar_lea.sflag [#allocation4], 1
    %2576 = vsyncpa %s2575, 1
    %2577 = vsyncpa [#allocation5], 1
    %s2578 = scalar_lea.sflag [#allocation5], 1
    %2579 = vsyncpa %s2578, 1

</llo_original>
